<compile_context>
chip_gen: v5e
topology: v5e:2x2
jax: 0.10.0
libtpu: 0.0.40
codegen_flags: <defaults>
</compile_context>

<pallas_src>
from functools import partial

import jax
import jax.numpy as jnp
from jax import lax
from jax.experimental import pallas as pl
from jax.experimental.pallas import tpu as pltpu

IMG_SHAPE = (1, 28, 28)
LATENT_DIM = 100
LATENT_PAD = 128                                      # lane-dense contraction dim
H1, H2 = 128, 256
OUT_DIM = IMG_SHAPE[0] * IMG_SHAPE[1] * IMG_SHAPE[2]  # 784
BN_EPS = 1e-5
LRELU_SLOPE = 0.2
MAX_TILE_B = 512                                      # batch-tile size cap


def _leaky_relu(x):
    # max(x, 0.2*x) == LeakyReLU(0.2) for slope in (0, 1); single VALU op.
    return jnp.maximum(x, LRELU_SLOPE * x)


def make_generator_kernel(*, tile_b: int, b_true: int, needs_mask: bool):
    """Two-pass kernel. Grid = (pass, batch_tile); pass 0 = BN stats, pass 1 = output."""
    inv_b = 1.0 / float(b_true)

    def kernel(z_ref, w1_ref, b1_ref, w2_ref, gamma_ref, beta_ref,
               w3_ref, b3_ref, out_ref, sum_ref, sumsq_ref):
        p = pl.program_id(0)   # 0: accumulate batch stats, 1: normalize + write output
        i = pl.program_id(1)   # batch-tile index

        # Shared front: Linear1 + LeakyReLU + Linear2 (bf16 MXU inputs, f32 accum).
        z = z_ref[...]                                   # already bf16, (tile_b, 128)
        h1 = jnp.dot(z, w1_ref[...], preferred_element_type=jnp.float32) + b1_ref[...]
        h1 = _leaky_relu(h1)
        h2 = jnp.dot(h1.astype(jnp.bfloat16), w2_ref[...],
                     preferred_element_type=jnp.float32)  # (tile_b, 256) f32

        @pl.when(p == 0)
        def _stats_pass():
            @pl.when(i == 0)
            def _init():
                sum_ref[...] = jnp.zeros_like(sum_ref)
                sumsq_ref[...] = jnp.zeros_like(sumsq_ref)

            if needs_mask:
                # Zero the zero-padded batch rows so they don't contaminate stats.
                row = i * tile_b + lax.broadcasted_iota(jnp.int32, (tile_b, H2), 0)
                h2s = jnp.where(row < b_true, h2, 0.0)
            else:
                h2s = h2
            sum_ref[...] += jnp.sum(h2s, axis=0, keepdims=True)
            sumsq_ref[...] += jnp.sum(h2s * h2s, axis=0, keepdims=True)

        @pl.when(p == 1)
        def _output_pass():
            # Training-mode BatchNorm with biased batch variance, folded into one FMA.
            mean = sum_ref[...] * inv_b
            var = jnp.maximum(sumsq_ref[...] * inv_b - mean * mean, 0.0)
            scale = gamma_ref[...] * lax.rsqrt(var + BN_EPS)   # (1, 256)
            shift = beta_ref[...] - mean * scale               # (1, 256)
            h2n = _leaky_relu(h2 * scale + shift)

            # Linear3 (256 -> 784) + tanh; direct lane-dense-ish store (6x128 + 16).
            h3 = jnp.dot(h2n.astype(jnp.bfloat16), w3_ref[...],
                         preferred_element_type=jnp.float32) + b3_ref[...]
            out_ref[...] = jnp.tanh(h3)

    return kernel


@partial(jax.jit, static_argnames=("max_tile_b",))
def generator_forward(z, params, *, max_tile_b=MAX_TILE_B):
    """z: (B, latent_dim) float32 -> (B, 1, 28, 28) float32 (training-mode BN)."""
    B = z.shape[0]
    assert B >= 2, "training-mode BatchNorm requires batch size >= 2"

    if B <= max_tile_b:
        tile_b = -(-B // 8) * 8          # single tile, rounded to sublane multiple
    else:
        tile_b = max_tile_b
    num_tiles = -(-B // tile_b)
    b_pad = num_tiles * tile_b
    needs_mask = b_pad != B

    # Pad latent 100 -> 128 (lane-dense K), pad ragged batch rows, cast to bf16 once.
    z_pad = jnp.pad(z, ((0, b_pad - B), (0, LATENT_PAD - LATENT_DIM))).astype(jnp.bfloat16)

    kernel = make_generator_kernel(tile_b=tile_b, b_true=B, needs_mask=needs_mask)

    const = lambda p, i: (0, 0)          # weights/biases: resident full-array blocks
    grid_spec = pltpu.PrefetchScalarGridSpec(
        num_scalar_prefetch=0,
        grid=(2, num_tiles),             # (pass, batch_tile); pass is the outer loop
        in_specs=[
            pl.BlockSpec((tile_b, LATENT_PAD), lambda p, i: (i, 0)),   # z
            pl.BlockSpec((LATENT_PAD, H1), const),                     # w1
            pl.BlockSpec((1, H1), const),                              # b1
            pl.BlockSpec((H1, H2), const),                             # w2
            pl.BlockSpec((1, H2), const),                              # gamma
            pl.BlockSpec((1, H2), const),                              # beta
            pl.BlockSpec((H2, OUT_DIM), const),                        # w3
            pl.BlockSpec((1, OUT_DIM), const),                         # b3
        ],
        # i*p => every pass-0 step aliases block 0, so no garbage tile is ever
        # flushed during the stats pass; pass 1 writes each block exactly once.
        out_specs=pl.BlockSpec((tile_b, OUT_DIM), lambda p, i: (i * p, 0)),
        scratch_shapes=[pltpu.VMEM((1, H2), jnp.float32),   # sum(h2)
                        pltpu.VMEM((1, H2), jnp.float32)],  # sum(h2^2)
    )

    out = pl.pallas_call(
        kernel,
        out_shape=jax.ShapeDtypeStruct((b_pad, OUT_DIM), jnp.float32),
        grid_spec=grid_spec,
        compiler_params=pltpu.CompilerParams(
            # Both axes sequential: pass order matters and the BN accumulators are
            # shared across batch tiles. TODO(synk): v7x cross-core stat reduction.
            dimension_semantics=("arbitrary", "arbitrary"),
            vmem_limit_bytes=32 << 20,   # scales with the tile, safe on v5e/v6e/v7x
        ),
    )(z_pad,
      params["w1"], params["b1"],
      params["w2"],
      params["gamma"], params["beta"],
      params["w3"], params["b3"])

    if needs_mask:
        out = out[:B]                    # only in the ragged-batch case
    return out.reshape(B, *IMG_SHAPE)


def generator_reference(z, params):
    """Pure-JAX reference with the same bf16 MXU-input casts (training-mode BN)."""
    B = z.shape[0]
    zp = jnp.pad(z, ((0, 0), (0, LATENT_PAD - LATENT_DIM))).astype(jnp.bfloat16)
    h1 = jnp.dot(zp, params["w1"], preferred_element_type=jnp.float32) + params["b1"]
    h1 = jnp.where(h1 > 0, h1, LRELU_SLOPE * h1)
    h2 = jnp.dot(h1.astype(jnp.bfloat16), params["w2"], preferred_element_type=jnp.float32)
    mean = jnp.mean(h2, axis=0, keepdims=True)
    var = jnp.mean((h2 - mean) ** 2, axis=0, keepdims=True)
    h2n = (h2 - mean) * lax.rsqrt(var + BN_EPS) * params["gamma"] + params["beta"]
    h2n = jnp.where(h2n > 0, h2n, LRELU_SLOPE * h2n)
    h3 = jnp.dot(h2n.astype(jnp.bfloat16), params["w3"],
                 preferred_element_type=jnp.float32) + params["b3"]
    return jnp.tanh(h3).reshape(B, *IMG_SHAPE)


def init_params(key):
    """Deterministic synthetic parameters matching the PyTorch module's shapes.

    Weights are (in_features, out_features) bf16; w1 rows zero-padded 100 -> 128
    (matches zero-padded z). Linear2 bias omitted (no-op before batch-stat BN).
    """
    ks = jax.random.split(key, 6)

    def lin(kw, kb, fan_in, fan_out):
        bound = 1.0 / jnp.sqrt(jnp.float32(fan_in))
        w = jax.random.uniform(kw, (fan_in, fan_out), jnp.float32, -bound, bound)
        b = jax.random.uniform(kb, (1, fan_out), jnp.float32, -bound, bound)
        return w, b

    w1, b1 = lin(ks[0], ks[1], LATENT_DIM, H1)
    w2, _b2 = lin(ks[2], ks[3], H1, H2)          # b2 dropped (no-op under BN)
    w3, b3 = lin(ks[4], ks[5], H2, OUT_DIM)

    w1p = jnp.pad(w1, ((0, LATENT_PAD - LATENT_DIM), (0, 0)))

    return {
        "w1": w1p.astype(jnp.bfloat16), "b1": b1,
        "w2": w2.astype(jnp.bfloat16),
        "gamma": jnp.ones((1, H2), jnp.float32),   # BatchNorm1d weight init
        "beta": jnp.zeros((1, H2), jnp.float32),   # BatchNorm1d bias init
        "w3": w3.astype(jnp.bfloat16), "b3": b3,
    }


if __name__ == "__main__":
    key = jax.random.PRNGKey(0)
    pkey, zkey1, zkey2 = jax.random.split(key, 3)
    params = init_params(pkey)

    # Case 1: small batch, single tile (grid = (2, 1)).
    z1 = jax.random.normal(zkey1, (8, LATENT_DIM), jnp.float32)
    img1 = generator_forward(z1, params)
    jax.block_until_ready(img1)
    assert img1.shape == (8, *IMG_SHAPE), img1.shape
    assert bool(jnp.all(jnp.isfinite(img1)))
    assert bool(jnp.all(jnp.abs(img1) <= 1.0 + 1e-6))      # tanh range
    ref1 = generator_reference(z1, params)
    err1 = float(jnp.max(jnp.abs(img1 - ref1)))
    assert err1 < 2e-2, err1

    # Case 2: ragged multi-tile path (3 tiles of 8, last tile masked) to exercise
    # the two-pass masked statistics and tiled output writes.
    z2 = jax.random.normal(zkey2, (20, LATENT_DIM), jnp.float32)
    img2 = generator_forward(z2, params, max_tile_b=8)
    jax.block_until_ready(img2)
    assert img2.shape == (20, *IMG_SHAPE), img2.shape
    ref2 = generator_reference(z2, params)
    err2 = float(jnp.max(jnp.abs(img2 - ref2)))
    assert err2 < 2e-2, err2

    print("KERNEL_OK")
</pallas_src>

<mosaic_0001>
module attributes {stable_mosaic.version = 11 : i64} {
  func.func @kernel(%arg0: i32, %arg1: i32, %arg2: memref<8x128xbf16, #tpu.memory_space<vmem>>, %arg3: memref<128x128xbf16, #tpu.memory_space<vmem>>, %arg4: memref<1x128xf32, #tpu.memory_space<vmem>>, %arg5: memref<128x256xbf16, #tpu.memory_space<vmem>>, %arg6: memref<1x256xf32, #tpu.memory_space<vmem>>, %arg7: memref<1x256xf32, #tpu.memory_space<vmem>>, %arg8: memref<256x784xbf16, #tpu.memory_space<vmem>>, %arg9: memref<1x784xf32, #tpu.memory_space<vmem>>, %arg10: memref<8x784xf32, #tpu.memory_space<vmem>>, %arg11: memref<1x256xf32, #tpu.memory_space<vmem>>, %arg12: memref<1x256xf32, #tpu.memory_space<vmem>>) attributes {dimension_semantics = [#tpu.dimension_semantics<arbitrary>, #tpu.dimension_semantics<arbitrary>], iteration_bounds = array<i64: 2, 1>, scalar_prefetch = 0 : i64, scratch_operands = 2 : i64, tpu.core_type = #tpu.core_type<tc>, window_params = [{transform_indices = @transform_0, window_bounds = array<i64: 8, 128>}, {pipeline_mode = #tpu.pipeline_mode<synchronous>, transform_indices = @transform_1, window_bounds = array<i64: 128, 128>}, {pipeline_mode = #tpu.pipeline_mode<synchronous>, transform_indices = @transform_2, window_bounds = array<i64: 1, 128>}, {pipeline_mode = #tpu.pipeline_mode<synchronous>, transform_indices = @transform_3, window_bounds = array<i64: 128, 256>}, {pipeline_mode = #tpu.pipeline_mode<synchronous>, transform_indices = @transform_4, window_bounds = array<i64: 1, 256>}, {pipeline_mode = #tpu.pipeline_mode<synchronous>, transform_indices = @transform_5, window_bounds = array<i64: 1, 256>}, {pipeline_mode = #tpu.pipeline_mode<synchronous>, transform_indices = @transform_6, window_bounds = array<i64: 256, 784>}, {pipeline_mode = #tpu.pipeline_mode<synchronous>, transform_indices = @transform_7, window_bounds = array<i64: 1, 784>}, {transform_indices = @transform_8, window_bounds = array<i64: 8, 784>}]} {
    %c0 = arith.constant 0 : index
    %c0_0 = arith.constant 0 : index
    %0 = vector.load %arg2[%c0, %c0_0] : memref<8x128xbf16, #tpu.memory_space<vmem>>, vector<8x128xbf16>
    %c0_1 = arith.constant 0 : index
    %c0_2 = arith.constant 0 : index
    %1 = vector.load %arg3[%c0_1, %c0_2] : memref<128x128xbf16, #tpu.memory_space<vmem>>, vector<128x128xbf16>
    %cst = arith.constant dense<0.000000e+00> : vector<8x128xf32>
    %2 = tpu.matmul %0, %1, %cst {dimension_numbers = #tpu.dot_dimension_numbers<[1], [0], [0], [1], [0, 0, 1, 1], [], []>} : vector<8x128xbf16>, vector<128x128xbf16>, vector<8x128xf32> -> vector<8x128xf32>
    %c0_3 = arith.constant 0 : index
    %c0_4 = arith.constant 0 : index
    %3 = vector.load %arg4[%c0_3, %c0_4] : memref<1x128xf32, #tpu.memory_space<vmem>>, vector<1x128xf32>
    %4 = vector.broadcast %3 : vector<1x128xf32> to vector<8x128xf32>
    %5 = arith.addf %2, %4 : vector<8x128xf32>
    %cst_5 = arith.constant 2.000000e-01 : f32
    %6 = vector.broadcast %cst_5 : f32 to vector<8x128xf32>
    %7 = arith.mulf %6, %5 : vector<8x128xf32>
    %8 = arith.maximumf %5, %7 : vector<8x128xf32>
    %9 = arith.truncf %8 : vector<8x128xf32> to vector<8x128xbf16>
    %c0_6 = arith.constant 0 : index
    %c0_7 = arith.constant 0 : index
    %10 = vector.load %arg5[%c0_6, %c0_7] : memref<128x256xbf16, #tpu.memory_space<vmem>>, vector<128x256xbf16>
    %cst_8 = arith.constant dense<0.000000e+00> : vector<8x256xf32>
    %11 = tpu.matmul %9, %10, %cst_8 {dimension_numbers = #tpu.dot_dimension_numbers<[1], [0], [0], [1], [0, 0, 1, 1], [], []>} : vector<8x128xbf16>, vector<128x256xbf16>, vector<8x256xf32> -> vector<8x256xf32>
    %c0_i32 = arith.constant 0 : i32
    %12 = arith.cmpi eq, %arg0, %c0_i32 : i32
    %13 = arith.extui %12 : i1 to i32
    %c0_i32_9 = arith.constant 0 : i32
    %14 = arith.cmpi ne, %13, %c0_i32_9 : i32
    scf.if %14 {
      %c0_i32_11 = arith.constant 0 : i32
      %18 = arith.cmpi eq, %arg1, %c0_i32_11 : i32
      %19 = arith.extui %18 : i1 to i32
      %c0_i32_12 = arith.constant 0 : i32
      %20 = arith.cmpi ne, %19, %c0_i32_12 : i32
      scf.if %20 {
        %cst_23 = arith.constant 0.000000e+00 : f32
        %32 = vector.broadcast %cst_23 : f32 to vector<1x256xf32>
        %c0_24 = arith.constant 0 : index
        %c0_25 = arith.constant 0 : index
        %33 = vector.load %arg11[%c0_24, %c0_25] : memref<1x256xf32, #tpu.memory_space<vmem>>, vector<1x256xf32>
        tpu.vector_store %arg11[%c0_24, %c0_25], %32 {strides = array<i32>} : memref<1x256xf32, #tpu.memory_space<vmem>>, vector<1x256xf32>,
        %cst_26 = arith.constant 0.000000e+00 : f32
        %34 = vector.broadcast %cst_26 : f32 to vector<1x256xf32>
        %c0_27 = arith.constant 0 : index
        %c0_28 = arith.constant 0 : index
        %35 = vector.load %arg12[%c0_27, %c0_28] : memref<1x256xf32, #tpu.memory_space<vmem>>, vector<1x256xf32>
        tpu.vector_store %arg12[%c0_27, %c0_28], %34 {strides = array<i32>} : memref<1x256xf32, #tpu.memory_space<vmem>>, vector<1x256xf32>,
      } else {
      }
      %c0_13 = arith.constant 0 : index
      %c0_14 = arith.constant 0 : index
      %21 = vector.load %arg11[%c0_13, %c0_14] : memref<1x256xf32, #tpu.memory_space<vmem>>, vector<1x256xf32>
      %cst_15 = arith.constant dense<0.000000e+00> : vector<256xf32>
      %22 = vector.multi_reduction <add>, %11, %cst_15 [0] : vector<8x256xf32> to vector<256xf32>
      %23 = vector.shape_cast %22 : vector<256xf32> to vector<1x256xf32>
      %24 = arith.addf %21, %23 : vector<1x256xf32>
      %c0_16 = arith.constant 0 : index
      %c0_17 = arith.constant 0 : index
      %25 = vector.load %arg11[%c0_16, %c0_17] : memref<1x256xf32, #tpu.memory_space<vmem>>, vector<1x256xf32>
      tpu.vector_store %arg11[%c0_16, %c0_17], %24 {strides = array<i32>} : memref<1x256xf32, #tpu.memory_space<vmem>>, vector<1x256xf32>,
      %c0_18 = arith.constant 0 : index
      %c0_19 = arith.constant 0 : index
      %26 = vector.load %arg12[%c0_18, %c0_19] : memref<1x256xf32, #tpu.memory_space<vmem>>, vector<1x256xf32>
      %27 = arith.mulf %11, %11 : vector<8x256xf32>
      %cst_20 = arith.constant dense<0.000000e+00> : vector<256xf32>
      %28 = vector.multi_reduction <add>, %27, %cst_20 [0] : vector<8x256xf32> to vector<256xf32>
      %29 = vector.shape_cast %28 : vector<256xf32> to vector<1x256xf32>
      %30 = arith.addf %26, %29 : vector<1x256xf32>
      %c0_21 = arith.constant 0 : index
      %c0_22 = arith.constant 0 : index
      %31 = vector.load %arg12[%c0_21, %c0_22] : memref<1x256xf32, #tpu.memory_space<vmem>>, vector<1x256xf32>
      tpu.vector_store %arg12[%c0_21, %c0_22], %30 {strides = array<i32>} : memref<1x256xf32, #tpu.memory_space<vmem>>, vector<1x256xf32>,
    } else {
    }
    %c1_i32 = arith.constant 1 : i32
    %15 = arith.cmpi eq, %arg0, %c1_i32 : i32
    %16 = arith.extui %15 : i1 to i32
    %c0_i32_10 = arith.constant 0 : i32
    %17 = arith.cmpi ne, %16, %c0_i32_10 : i32
    scf.if %17 {
      %c0_11 = arith.constant 0 : index
      %c0_12 = arith.constant 0 : index
      %18 = vector.load %arg11[%c0_11, %c0_12] : memref<1x256xf32, #tpu.memory_space<vmem>>, vector<1x256xf32>
      %cst_13 = arith.constant 1.250000e-01 : f32
      %19 = vector.broadcast %cst_13 : f32 to vector<1x256xf32>
      %20 = arith.mulf %18, %19 : vector<1x256xf32>
      %c0_14 = arith.constant 0 : index
      %c0_15 = arith.constant 0 : index
      %21 = vector.load %arg12[%c0_14, %c0_15] : memref<1x256xf32, #tpu.memory_space<vmem>>, vector<1x256xf32>
      %cst_16 = arith.constant 1.250000e-01 : f32
      %22 = vector.broadcast %cst_16 : f32 to vector<1x256xf32>
      %23 = arith.mulf %21, %22 : vector<1x256xf32>
      %24 = arith.mulf %20, %20 : vector<1x256xf32>
      %25 = arith.subf %23, %24 : vector<1x256xf32>
      %cst_17 = arith.constant 0.000000e+00 : f32
      %26 = vector.broadcast %cst_17 : f32 to vector<1x256xf32>
      %27 = arith.maximumf %25, %26 : vector<1x256xf32>
      %c0_18 = arith.constant 0 : index
      %c0_19 = arith.constant 0 : index
      %28 = vector.load %arg6[%c0_18, %c0_19] : memref<1x256xf32, #tpu.memory_space<vmem>>, vector<1x256xf32>
      %cst_20 = arith.constant 9.99999974E-6 : f32
      %29 = vector.broadcast %cst_20 : f32 to vector<1x256xf32>
      %30 = arith.addf %27, %29 : vector<1x256xf32>
      %31 = math.rsqrt %30 : vector<1x256xf32>
      %32 = arith.mulf %28, %31 : vector<1x256xf32>
      %c0_21 = arith.constant 0 : index
      %c0_22 = arith.constant 0 : index
      %33 = vector.load %arg7[%c0_21, %c0_22] : memref<1x256xf32, #tpu.memory_space<vmem>>, vector<1x256xf32>
      %34 = arith.mulf %20, %32 : vector<1x256xf32>
      %35 = arith.subf %33, %34 : vector<1x256xf32>
      %36 = vector.broadcast %32 : vector<1x256xf32> to vector<8x256xf32>
      %37 = arith.mulf %11, %36 : vector<8x256xf32>
      %38 = vector.broadcast %35 : vector<1x256xf32> to vector<8x256xf32>
      %39 = arith.addf %37, %38 : vector<8x256xf32>
      %cst_23 = arith.constant 2.000000e-01 : f32
      %40 = vector.broadcast %cst_23 : f32 to vector<8x256xf32>
      %41 = arith.mulf %40, %39 : vector<8x256xf32>
      %42 = arith.maximumf %39, %41 : vector<8x256xf32>
      %43 = arith.truncf %42 : vector<8x256xf32> to vector<8x256xbf16>
      %c0_24 = arith.constant 0 : index
      %c0_25 = arith.constant 0 : index
      %44 = vector.load %arg8[%c0_24, %c0_25] : memref<256x784xbf16, #tpu.memory_space<vmem>>, vector<256x784xbf16>
      %cst_26 = arith.constant dense<0.000000e+00> : vector<8x784xf32>
      %45 = tpu.matmul %43, %44, %cst_26 {dimension_numbers = #tpu.dot_dimension_numbers<[1], [0], [0], [1], [0, 0, 1, 1], [], []>} : vector<8x256xbf16>, vector<256x784xbf16>, vector<8x784xf32> -> vector<8x784xf32>
      %c0_27 = arith.constant 0 : index
      %c0_28 = arith.constant 0 : index
      %46 = vector.load %arg9[%c0_27, %c0_28] : memref<1x784xf32, #tpu.memory_space<vmem>>, vector<1x784xf32>
      %47 = vector.broadcast %46 : vector<1x784xf32> to vector<8x784xf32>
      %48 = arith.addf %45, %47 : vector<8x784xf32>
      %49 = math.tanh %48 : vector<8x784xf32>
      %c0_29 = arith.constant 0 : index
      %c0_30 = arith.constant 0 : index
      %50 = vector.load %arg10[%c0_29, %c0_30] : memref<8x784xf32, #tpu.memory_space<vmem>>, vector<8x784xf32>
      tpu.vector_store %arg10[%c0_29, %c0_30], %49 {strides = array<i32>} : memref<8x784xf32, #tpu.memory_space<vmem>>, vector<8x784xf32>,
    } else {
    }
    return
  }
  func.func @transform_0(%arg0: i32, %arg1: i32) -> (i32, i32) {
    %c0_i32 = arith.constant 0 : i32
    %c0_i32_0 = arith.constant 0 : i32
    return %arg1, %c0_i32 : i32, i32
  }
  func.func @transform_1(%arg0: i32, %arg1: i32) -> (i32, i32) {
    %c0_i32 = arith.constant 0 : i32
    %c0_i32_0 = arith.constant 0 : i32
    %c0_i32_1 = arith.constant 0 : i32
    return %c0_i32, %c0_i32_0 : i32, i32
  }
  func.func @transform_2(%arg0: i32, %arg1: i32) -> (i32, i32) {
    %c0_i32 = arith.constant 0 : i32
    %c0_i32_0 = arith.constant 0 : i32
    %c0_i32_1 = arith.constant 0 : i32
    return %c0_i32, %c0_i32_0 : i32, i32
  }
  func.func @transform_3(%arg0: i32, %arg1: i32) -> (i32, i32) {
    %c0_i32 = arith.constant 0 : i32
    %c0_i32_0 = arith.constant 0 : i32
    %c0_i32_1 = arith.constant 0 : i32
    return %c0_i32, %c0_i32_0 : i32, i32
  }
  func.func @transform_4(%arg0: i32, %arg1: i32) -> (i32, i32) {
    %c0_i32 = arith.constant 0 : i32
    %c0_i32_0 = arith.constant 0 : i32
    %c0_i32_1 = arith.constant 0 : i32
    return %c0_i32, %c0_i32_0 : i32, i32
  }
  func.func @transform_5(%arg0: i32, %arg1: i32) -> (i32, i32) {
    %c0_i32 = arith.constant 0 : i32
    %c0_i32_0 = arith.constant 0 : i32
    %c0_i32_1 = arith.constant 0 : i32
    return %c0_i32, %c0_i32_0 : i32, i32
  }
  func.func @transform_6(%arg0: i32, %arg1: i32) -> (i32, i32) {
    %c0_i32 = arith.constant 0 : i32
    %c0_i32_0 = arith.constant 0 : i32
    %c0_i32_1 = arith.constant 0 : i32
    return %c0_i32, %c0_i32_0 : i32, i32
  }
  func.func @transform_7(%arg0: i32, %arg1: i32) -> (i32, i32) {
    %c0_i32 = arith.constant 0 : i32
    %c0_i32_0 = arith.constant 0 : i32
    %c0_i32_1 = arith.constant 0 : i32
    return %c0_i32, %c0_i32_0 : i32, i32
  }
  func.func @transform_8(%arg0: i32, %arg1: i32) -> (i32, i32) {
    %0 = arith.muli %arg1, %arg0 : i32
    %c0_i32 = arith.constant 0 : i32
    %c0_i32_0 = arith.constant 0 : i32
    return %0, %c0_i32 : i32, i32
  }
}

</mosaic_0001>

<llo_original>
// kernel: generator_forward.1
$region0: #{generator_forward.1}
  #allocation0 [shape = 'u32[]', space=smem, size = 0x4, offset = 0x4, fixed_abs, tag = 'smem constant byte address 0x4 - core index']
  #allocation1 [shape = 'u32[72,128]{1,0:T(1,128)}', space=vmem, size = 0x9000, scoped, tag = 'internal scratch']
  #allocation2 [shape = 'f32[1,256]{1,0:T(1,128)}', space=vmem, size = 0x400, scoped, tag = 'scratch operand']
  #allocation3 [shape = 'f32[1,256]{1,0:T(1,128)}', space=vmem, size = 0x400, scoped, tag = 'scratch operand']
  %s0 = inlined_call_operand.vmem [shape: bf16[8,128], index: 0, kind: input, shape index: {}]
  %s1 = inlined_call_operand.vmem [shape: bf16[128,128], index: 1, kind: input, shape index: {}]
  %s2 = inlined_call_operand.vmem [shape: f32[1,128], index: 2, kind: input, shape index: {}]
  %s3 = inlined_call_operand.vmem [shape: bf16[128,256], index: 3, kind: input, shape index: {}]
  %s4 = inlined_call_operand.vmem [shape: f32[1,256], index: 4, kind: input, shape index: {}]
  %s5 = inlined_call_operand.vmem [shape: f32[1,256], index: 5, kind: input, shape index: {}]
  %s6 = inlined_call_operand.vmem [shape: bf16[256,784], index: 6, kind: input, shape index: {}]
  %s7 = inlined_call_operand.vmem [shape: f32[1,784], index: 7, kind: input, shape index: {}]
  %s8 = inlined_call_operand.vmem [shape: f32[8,784], index: 8, kind: output, shape index: {}]
  %s9 = sld [smem:[#allocation0]]
  $region77: #{generator_forward.1} parent=0
    _
  %s11 = ssub.s32 1, %s9
  %s12 = scalar_select 0, %s11, %s9
  loop: start=0, step=1, limit=4
  $region2: #{generator_forward.1} parent=0 // loop_pre_header
    _
  $region3: #{generator_forward.1} parent=0 // loop_header
    %s14 = sphi 0, %s18
    %p15 = scmp.ge.s32.totalorder %s14, 4
    %s21 = sphi 0, %s33
    %s22 = sphi 0, %s29
    %s23 = sphi 0, %s21
    %s24 = sphi 0, %s22
    %s25 = sphi 0, %s23
    %s26 = sphi 0, %s24
    %s36 = sphi 0, %s38
    %s39 = sphi 0, %s36
    %s40 = sphi 0, %s39
    %s56 = sphi 0, %s40
    %s60 = sphi 0, %s60
    %s62 = sphi 0, %s60
    %s63 = sphi 0, %s62
    %s77 = sphi 0, %s63
    %s81 = sphi 0, %s81
    %s83 = sphi 0, %s81
    %s84 = sphi 0, %s83
    %s98 = sphi 0, %s84
    %s102 = sphi 0, %s102
    %s104 = sphi 0, %s102
    %s105 = sphi 0, %s104
    %s119 = sphi 0, %s105
    %s123 = sphi 0, %s123
    %s125 = sphi 0, %s123
    %s126 = sphi 0, %s125
    %s140 = sphi 0, %s126
    %s144 = sphi 0, %s144
    %s146 = sphi 0, %s144
    %s147 = sphi 0, %s146
    %s161 = sphi 0, %s147
    %s165 = sphi 0, %s165
    %s167 = sphi 0, %s165
    %s168 = sphi 0, %s167
    %s182 = sphi 0, %s168
    %s186 = sphi 0, %s186
    %s188 = sphi 0, %s186
    %s189 = sphi 0, %s188
    %s203 = sphi 0, %s189
    %s211 = sphi 0, %s213
    %s214 = sphi 0, %s211
    %s215 = sphi 0, %s214
    %s231 = sphi 0, %s215
  $region4: #{generator_forward.1} parent=0 // loop_header_branch
    %17 = sbr.rel (%p15) target = $region8
  $region5: #{generator_forward.1} parent=0 // loop_body
    %s19 = ssub.s32 %s14, 1
    %s20 = ssub.s32 %s14, 2
    %s27 = sadd.s32 1, %s22
    %p28 = scmp.ge.s32.totalorder %s27, 1
    %s29 = scalar_select %p28, 0, %s27
    %s30 = sadd.s32 1, %s21
    %s31 = scalar_select %p28, %s30, %s21
    %p32 = scmp.ge.s32.totalorder %s31, 2
    %s33 = scalar_select %p32, 0, %s31
    %s34 = ssub.s32 %s22, %s29
    %p35 = scmp.eq.s32.totalorder %s34, 0
    %s37 = sadd.s32 %s36, 1
    %s38 = scalar_select %p35, %s36, %s37
    %p41 = pneg %p35
    %p42 = scmp.eq.s32.totalorder %s14, 1
    %p43 = por %p41, %p42
    %p44 = scmp.ne.s32.totalorder %s36, %s39
    %p45 = scmp.eq.s32.totalorder %s14, 0
    %p46 = por %p44, %p45
    %p47 = scmp.ne.s32.totalorder %s36, %s39
    %p48 = scmp.eq.s32.totalorder %s19, 1
    %p49 = por %p47, %p48
    %p50 = scmp.ne.s32.totalorder %s39, %s40
    %p51 = scmp.eq.s32.totalorder %s19, 0
    %p52 = por %p50, %p51
    %p53 = scmp.ne.s32.totalorder %s39, %s40
    %p54 = scmp.eq.s32.totalorder %s20, 1
    %p55 = por %p53, %p54
    %p57 = scmp.ne.s32.totalorder %s40, %s56
    %p58 = scmp.eq.s32.totalorder %s20, 0
    %p59 = por %p57, %p58
    %s61 = sadd.s32 %s60, 1
    %p64 = scmp.eq.s32.totalorder %s14, 1
    %p65 = scmp.ne.s32.totalorder %s60, %s62
    %p66 = scmp.eq.s32.totalorder %s14, 0
    %p67 = por %p65, %p66
    %p68 = scmp.ne.s32.totalorder %s60, %s62
    %p69 = scmp.eq.s32.totalorder %s19, 1
    %p70 = por %p68, %p69
    %p71 = scmp.ne.s32.totalorder %s62, %s63
    %p72 = scmp.eq.s32.totalorder %s19, 0
    %p73 = por %p71, %p72
    %p74 = scmp.ne.s32.totalorder %s62, %s63
    %p75 = scmp.eq.s32.totalorder %s20, 1
    %p76 = por %p74, %p75
    %p78 = scmp.ne.s32.totalorder %s63, %s77
    %p79 = scmp.eq.s32.totalorder %s20, 0
    %p80 = por %p78, %p79
    %s82 = sadd.s32 %s81, 1
    %p85 = scmp.eq.s32.totalorder %s14, 1
    %p86 = scmp.ne.s32.totalorder %s81, %s83
    %p87 = scmp.eq.s32.totalorder %s14, 0
    %p88 = por %p86, %p87
    %p89 = scmp.ne.s32.totalorder %s81, %s83
    %p90 = scmp.eq.s32.totalorder %s19, 1
    %p91 = por %p89, %p90
    %p92 = scmp.ne.s32.totalorder %s83, %s84
    %p93 = scmp.eq.s32.totalorder %s19, 0
    %p94 = por %p92, %p93
    %p95 = scmp.ne.s32.totalorder %s83, %s84
    %p96 = scmp.eq.s32.totalorder %s20, 1
    %p97 = por %p95, %p96
    %p99 = scmp.ne.s32.totalorder %s84, %s98
    %p100 = scmp.eq.s32.totalorder %s20, 0
    %p101 = por %p99, %p100
    %s103 = sadd.s32 %s102, 1
    %p106 = scmp.eq.s32.totalorder %s14, 1
    %p107 = scmp.ne.s32.totalorder %s102, %s104
    %p108 = scmp.eq.s32.totalorder %s14, 0
    %p109 = por %p107, %p108
    %p110 = scmp.ne.s32.totalorder %s102, %s104
    %p111 = scmp.eq.s32.totalorder %s19, 1
    %p112 = por %p110, %p111
    %p113 = scmp.ne.s32.totalorder %s104, %s105
    %p114 = scmp.eq.s32.totalorder %s19, 0
    %p115 = por %p113, %p114
    %p116 = scmp.ne.s32.totalorder %s104, %s105
    %p117 = scmp.eq.s32.totalorder %s20, 1
    %p118 = por %p116, %p117
    %p120 = scmp.ne.s32.totalorder %s105, %s119
    %p121 = scmp.eq.s32.totalorder %s20, 0
    %p122 = por %p120, %p121
    %s124 = sadd.s32 %s123, 1
    %p127 = scmp.eq.s32.totalorder %s14, 1
    %p128 = scmp.ne.s32.totalorder %s123, %s125
    %p129 = scmp.eq.s32.totalorder %s14, 0
    %p130 = por %p128, %p129
    %p131 = scmp.ne.s32.totalorder %s123, %s125
    %p132 = scmp.eq.s32.totalorder %s19, 1
    %p133 = por %p131, %p132
    %p134 = scmp.ne.s32.totalorder %s125, %s126
    %p135 = scmp.eq.s32.totalorder %s19, 0
    %p136 = por %p134, %p135
    %p137 = scmp.ne.s32.totalorder %s125, %s126
    %p138 = scmp.eq.s32.totalorder %s20, 1
    %p139 = por %p137, %p138
    %p141 = scmp.ne.s32.totalorder %s126, %s140
    %p142 = scmp.eq.s32.totalorder %s20, 0
    %p143 = por %p141, %p142
    %s145 = sadd.s32 %s144, 1
    %p148 = scmp.eq.s32.totalorder %s14, 1
    %p149 = scmp.ne.s32.totalorder %s144, %s146
    %p150 = scmp.eq.s32.totalorder %s14, 0
    %p151 = por %p149, %p150
    %p152 = scmp.ne.s32.totalorder %s144, %s146
    %p153 = scmp.eq.s32.totalorder %s19, 1
    %p154 = por %p152, %p153
    %p155 = scmp.ne.s32.totalorder %s146, %s147
    %p156 = scmp.eq.s32.totalorder %s19, 0
    %p157 = por %p155, %p156
    %p158 = scmp.ne.s32.totalorder %s146, %s147
    %p159 = scmp.eq.s32.totalorder %s20, 1
    %p160 = por %p158, %p159
    %p162 = scmp.ne.s32.totalorder %s147, %s161
    %p163 = scmp.eq.s32.totalorder %s20, 0
    %p164 = por %p162, %p163
    %s166 = sadd.s32 %s165, 1
    %p169 = scmp.eq.s32.totalorder %s14, 1
    %p170 = scmp.ne.s32.totalorder %s165, %s167
    %p171 = scmp.eq.s32.totalorder %s14, 0
    %p172 = por %p170, %p171
    %p173 = scmp.ne.s32.totalorder %s165, %s167
    %p174 = scmp.eq.s32.totalorder %s19, 1
    %p175 = por %p173, %p174
    %p176 = scmp.ne.s32.totalorder %s167, %s168
    %p177 = scmp.eq.s32.totalorder %s19, 0
    %p178 = por %p176, %p177
    %p179 = scmp.ne.s32.totalorder %s167, %s168
    %p180 = scmp.eq.s32.totalorder %s20, 1
    %p181 = por %p179, %p180
    %p183 = scmp.ne.s32.totalorder %s168, %s182
    %p184 = scmp.eq.s32.totalorder %s20, 0
    %p185 = por %p183, %p184
    %s187 = sadd.s32 %s186, 1
    %p190 = scmp.eq.s32.totalorder %s14, 1
    %p191 = scmp.ne.s32.totalorder %s186, %s188
    %p192 = scmp.eq.s32.totalorder %s14, 0
    %p193 = por %p191, %p192
    %p194 = scmp.ne.s32.totalorder %s186, %s188
    %p195 = scmp.eq.s32.totalorder %s19, 1
    %p196 = por %p194, %p195
    %p197 = scmp.ne.s32.totalorder %s188, %s189
    %p198 = scmp.eq.s32.totalorder %s19, 0
    %p199 = por %p197, %p198
    %p200 = scmp.ne.s32.totalorder %s188, %s189
    %p201 = scmp.eq.s32.totalorder %s20, 1
    %p202 = por %p200, %p201
    %p204 = scmp.ne.s32.totalorder %s189, %s203
    %p205 = scmp.eq.s32.totalorder %s20, 0
    %p206 = por %p204, %p205
    %s207 = smul.u32 %s22, %s21
    %s208 = smul.u32 %s29, %s33
    %s209 = ssub.s32 %s207, %s208
    %p210 = scmp.eq.s32.totalorder %s209, 0
    %s212 = sadd.s32 %s211, 1
    %s213 = scalar_select %p210, %s211, %s212
    %p216 = pneg %p210
    %p217 = scmp.eq.s32.totalorder %s14, 1
    %p218 = por %p216, %p217
    %p219 = scmp.ne.s32.totalorder %s211, %s214
    %p220 = scmp.eq.s32.totalorder %s14, 0
    %p221 = por %p219, %p220
    %p222 = scmp.ne.s32.totalorder %s211, %s214
    %p223 = scmp.eq.s32.totalorder %s19, 1
    %p224 = por %p222, %p223
    %p225 = scmp.ne.s32.totalorder %s214, %s215
    %p226 = scmp.eq.s32.totalorder %s19, 0
    %p227 = por %p225, %p226
    %p228 = scmp.ne.s32.totalorder %s214, %s215
    %p229 = scmp.eq.s32.totalorder %s20, 1
    %p230 = por %p228, %p229
    %p232 = scmp.ne.s32.totalorder %s215, %s231
    %p233 = scmp.eq.s32.totalorder %s20, 0
    %p234 = por %p232, %p233
    %p235 = scmp.le.s32.totalorder 1, %s14
    %p236 = scmp.lt.s32.totalorder %s14, 3
    %p237 = pnand %p235, %p236
    %p238 = pneg %p237
    // Predicated region
    $region9: #{generator_forward.1} parent=5 // pred_check
      _
    $region10: #{generator_forward.1} parent=5 // pred_check_branch
      %240 = sbr.rel (%p237) target = $region12
    $region11: #{generator_forward.1} parent=5 // pred_region
      %s241 = ssub.s32 %s14, 1
      // Predicated region
      $region13: #{generator_forward.1} parent=11 // pred_check
        %p242 = pneg %p52
      $region14: #{generator_forward.1} parent=11 // pred_check_branch
        %244 = sbr.rel (%p242) target = $region16
      $region15: #{generator_forward.1} parent=11 // pred_region
        %p245 = scmp.lt.s32.totalorder %s24, 0
        %s246 = scalar_select %p245, %s24, 0
        %s247 = smul.addr %s246, 4
        %s248 = scalar_lea.vmem %s0, %s247
      $region16: #{generator_forward.1} parent=11 // pred_fallthru
        _
      // Predicated region
      $region17: #{generator_forward.1} parent=11 // pred_check
        %p249 = pneg %p73
      $region18: #{generator_forward.1} parent=11 // pred_check_branch
        %251 = sbr.rel (%p249) target = $region20
      $region19: #{generator_forward.1} parent=11 // pred_region
        _
      $region20: #{generator_forward.1} parent=11 // pred_fallthru
        _
      // Predicated region
      $region21: #{generator_forward.1} parent=11 // pred_check
        %p252 = pneg %p94
      $region22: #{generator_forward.1} parent=11 // pred_check_branch
        %254 = sbr.rel (%p252) target = $region24
      $region23: #{generator_forward.1} parent=11 // pred_region
        _
      $region24: #{generator_forward.1} parent=11 // pred_fallthru
        _
      // Predicated region
      $region25: #{generator_forward.1} parent=11 // pred_check
        %p255 = pneg %p115
      $region26: #{generator_forward.1} parent=11 // pred_check_branch
        %257 = sbr.rel (%p255) target = $region28
      $region27: #{generator_forward.1} parent=11 // pred_region
        _
      $region28: #{generator_forward.1} parent=11 // pred_fallthru
        _
      // Predicated region
      $region29: #{generator_forward.1} parent=11 // pred_check
        %p258 = pneg %p136
      $region30: #{generator_forward.1} parent=11 // pred_check_branch
        %260 = sbr.rel (%p258) target = $region32
      $region31: #{generator_forward.1} parent=11 // pred_region
        _
      $region32: #{generator_forward.1} parent=11 // pred_fallthru
        _
      // Predicated region
      $region33: #{generator_forward.1} parent=11 // pred_check
        %p261 = pneg %p157
      $region34: #{generator_forward.1} parent=11 // pred_check_branch
        %263 = sbr.rel (%p261) target = $region36
      $region35: #{generator_forward.1} parent=11 // pred_region
        _
      $region36: #{generator_forward.1} parent=11 // pred_fallthru
        _
      // Predicated region
      $region37: #{generator_forward.1} parent=11 // pred_check
        %p264 = pneg %p178
      $region38: #{generator_forward.1} parent=11 // pred_check_branch
        %266 = sbr.rel (%p264) target = $region40
      $region39: #{generator_forward.1} parent=11 // pred_region
        _
      $region40: #{generator_forward.1} parent=11 // pred_fallthru
        _
      // Predicated region
      $region41: #{generator_forward.1} parent=11 // pred_check
        %p267 = pneg %p199
      $region42: #{generator_forward.1} parent=11 // pred_check_branch
        %269 = sbr.rel (%p267) target = $region44
      $region43: #{generator_forward.1} parent=11 // pred_region
        _
      $region44: #{generator_forward.1} parent=11 // pred_fallthru
        _
    $region12: #{generator_forward.1} parent=5 // pred_fallthru
      _
    %p270 = scmp.lt.s32.totalorder %s14, 2
    // Predicated region
    $region45: #{generator_forward.1} parent=5 // pred_check
      %p271 = pneg %p270
    $region46: #{generator_forward.1} parent=5 // pred_check_branch
      %273 = sbr.rel (%p271) target = $region48
    $region47: #{generator_forward.1} parent=5 // pred_region
      _
    $region48: #{generator_forward.1} parent=5 // pred_fallthru
      _
    %p274 = scmp.le.s32.totalorder 1, %s14
    %p275 = scmp.lt.s32.totalorder %s14, 3
    %p276 = pnand %p274, %p275
    %p277 = pneg %p276
    // Predicated region
    $region49: #{generator_forward.1} parent=5 // pred_check
      _
    $region50: #{generator_forward.1} parent=5 // pred_check_branch
      %279 = sbr.rel (%p276) target = $region52
    $region51: #{generator_forward.1} parent=5 // pred_region
      %s280 = ssub.s32 %s14, 1
      %p281 = scmp.lt.s32.totalorder %s24, 0
      %s282 = scalar_select %p281, %s24, 0
      %s283 = smul.addr %s282, 4
      %s284 = scalar_lea.vmem %s0, %s283
      %p285 = pneg %p52
      %p286 = pneg %p49
      %p287 = pneg %p73
      %p288 = pneg %p70
      %p289 = pneg %p94
      %p290 = pneg %p91
      %p291 = pneg %p115
      %p292 = pneg %p112
      %p293 = pneg %p136
      %p294 = pneg %p133
      %p295 = pneg %p157
      %p296 = pneg %p154
      %p297 = pneg %p178
      %p298 = pneg %p175
      %p299 = pneg %p199
      %p300 = pneg %p196
      %p301 = pneg %p227
      %p302 = pneg %p224
      %s303 = smul.u32 %s24, %s23
      %p304 = scmp.lt.s32.totalorder %s303, 0
      %s305 = scalar_select %p304, %s303, 0
      %s306 = smul.addr %s305, 7
      %s307 = smul.addr %s306, 8
      %s308 = scalar_lea.vmem %s8, %s307
      %p309 = scmp.lt.s32.totalorder %s24, 0
      %s310 = scalar_select %p309, %s24, 0
      %s311 = smul.addr %s310, 4
      %s312 = scalar_lea.vmem %s0, %s311
      %s313 = smul.u32 %s24, %s23
      %p314 = scmp.lt.s32.totalorder %s313, 0
      %s315 = scalar_select %p314, %s313, 0
      %s316 = smul.addr %s315, 7
      %s317 = smul.addr %s316, 8
      %s318 = scalar_lea.vmem %s8, %s317
      %s319 = smul.u32 %s24, %s23
      %v320 = vld [vmem:[%s312] sm:$0xf]
      %v321 = vld [vmem:[%s1] sm:$0xf]
      %v322 = vld [vmem:[%s1 + $0x4] sm:$0xf]
      %v323 = vld [vmem:[%s1 + $0x8] sm:$0xf]
      %v324 = vld [vmem:[%s1 + $0xc] sm:$0xf]
      %v325 = vld [vmem:[%s1 + $0x10] sm:$0xf]
      %v326 = vld [vmem:[%s1 + $0x14] sm:$0xf]
      %v327 = vld [vmem:[%s1 + $0x18] sm:$0xf]
      %v328 = vld [vmem:[%s1 + $0x1c] sm:$0xf]
      %v329 = vld [vmem:[%s1 + $0x20] sm:$0xf]
      %v330 = vld [vmem:[%s1 + $0x24] sm:$0xf]
      %v331 = vld [vmem:[%s1 + $0x28] sm:$0xf]
      %v332 = vld [vmem:[%s1 + $0x2c] sm:$0xf]
      %v333 = vld [vmem:[%s1 + $0x30] sm:$0xf]
      %v334 = vld [vmem:[%s1 + $0x34] sm:$0xf]
      %v335 = vld [vmem:[%s1 + $0x38] sm:$0xf]
      %v336 = vld [vmem:[%s1 + $0x3c] sm:$0xf]
      %v337 = vld [vmem:[%s2] sm:$0x1]
      %v339 = vperm.slane %v337, 0
      %v357 = vunpack.c.l.b16 %v321
      %v358 = vunpack.c.l.b16 %v322
      %v359 = vunpack.c.l.b16 %v323
      %v360 = vunpack.c.l.b16 %v324
      %v361 = vunpack.c.l.b16 %v325
      %v362 = vunpack.c.l.b16 %v326
      %v363 = vunpack.c.l.b16 %v327
      %v364 = vunpack.c.l.b16 %v328
      %v365 = vunpack.c.l.b16 %v329
      %v366 = vunpack.c.l.b16 %v330
      %v367 = vunpack.c.l.b16 %v331
      %v368 = vunpack.c.l.b16 %v332
      %v369 = vunpack.c.l.b16 %v333
      %v370 = vunpack.c.l.b16 %v334
      %v371 = vunpack.c.l.b16 %v335
      %v372 = vunpack.c.l.b16 %v336
      %v373 = vpack.c.b16 %v358, %v357
      %v374 = vpack.c.b16 %v360, %v359
      %v375 = vpack.c.b16 %v362, %v361
      %v376 = vpack.c.b16 %v364, %v363
      %v377 = vpack.c.b16 %v366, %v365
      %v378 = vpack.c.b16 %v368, %v367
      %v379 = vpack.c.b16 %v370, %v369
      %v380 = vpack.c.b16 %v372, %v371
      %389 = vmatpush.bf16.msra.mxu0 %v380
      %390 = vmatpush.bf16.msra.mxu0 %v379
      %391 = vmatpush.bf16.msra.mxu0 %v378
      %392 = vmatpush.bf16.msra.mxu0 %v377
      %393 = vmatpush.bf16.msra.mxu0 %v376
      %394 = vmatpush.bf16.msra.mxu0 %v375
      %395 = vmatpush.bf16.msra.mxu0 %v374
      %396 = vmatpush.bf16.msra.mxu0 %v373
      %397 = vmatmul.bf16.gmra.mxu0 %v320
      %v398 = vpop.f32.mrf.mxu0
      %v399 = vadd.f32 %v339, %v398
      %v400 = vpop.f32.mrf.mxu0
      %401 = vdwg.mxu0
      %v402 = vmul.f32 %v399, 0.2
      %v403 = vmax.f32 %v399, %v402
      %v404 = vpack.c.bf16 %v403, %v403
      %v405 = vld [vmem:[%s3] sm:$0xff]
      %v406 = vld [vmem:[%s3 + $0x8] sm:$0xff]
      %v407 = vld [vmem:[%s3 + $0x10] sm:$0xff]
      %v408 = vld [vmem:[%s3 + $0x18] sm:$0xff]
      %v409 = vld [vmem:[%s3 + $0x20] sm:$0xff]
      %v410 = vld [vmem:[%s3 + $0x28] sm:$0xff]
      %v411 = vld [vmem:[%s3 + $0x30] sm:$0xff]
      %v412 = vld [vmem:[%s3 + $0x38] sm:$0xff]
      %v413 = vld [vmem:[%s3 + $0x40] sm:$0xff]
      %v414 = vld [vmem:[%s3 + $0x48] sm:$0xff]
      %v415 = vld [vmem:[%s3 + $0x50] sm:$0xff]
      %v416 = vld [vmem:[%s3 + $0x58] sm:$0xff]
      %v417 = vld [vmem:[%s3 + $0x60] sm:$0xff]
      %v418 = vld [vmem:[%s3 + $0x68] sm:$0xff]
      %v419 = vld [vmem:[%s3 + $0x70] sm:$0xff]
      %v420 = vld [vmem:[%s3 + $0x78] sm:$0xff]
      %v437 = vunpack.c.l.b16 %v405
      %v438 = vunpack.c.h.b16 %v405
      %v439 = vunpack.c.l.b16 %v406
      %v440 = vunpack.c.h.b16 %v406
      %v441 = vunpack.c.l.b16 %v407
      %v442 = vunpack.c.h.b16 %v407
      %v443 = vunpack.c.l.b16 %v408
      %v444 = vunpack.c.h.b16 %v408
      %v445 = vunpack.c.l.b16 %v409
      %v446 = vunpack.c.h.b16 %v409
      %v447 = vunpack.c.l.b16 %v410
      %v448 = vunpack.c.h.b16 %v410
      %v449 = vunpack.c.l.b16 %v411
      %v450 = vunpack.c.h.b16 %v411
      %v451 = vunpack.c.l.b16 %v412
      %v452 = vunpack.c.h.b16 %v412
      %v453 = vunpack.c.l.b16 %v413
      %v454 = vunpack.c.h.b16 %v413
      %v455 = vunpack.c.l.b16 %v414
      %v456 = vunpack.c.h.b16 %v414
      %v457 = vunpack.c.l.b16 %v415
      %v458 = vunpack.c.h.b16 %v415
      %v459 = vunpack.c.l.b16 %v416
      %v460 = vunpack.c.h.b16 %v416
      %v461 = vunpack.c.l.b16 %v417
      %v462 = vunpack.c.h.b16 %v417
      %v463 = vunpack.c.l.b16 %v418
      %v464 = vunpack.c.h.b16 %v418
      %v465 = vunpack.c.l.b16 %v419
      %v466 = vunpack.c.h.b16 %v419
      %v467 = vunpack.c.l.b16 %v420
      %v468 = vunpack.c.h.b16 %v420
      %v469 = vpack.c.b16 %v439, %v437
      %v470 = vpack.c.b16 %v440, %v438
      %v471 = vpack.c.b16 %v443, %v441
      %v472 = vpack.c.b16 %v444, %v442
      %v473 = vpack.c.b16 %v447, %v445
      %v474 = vpack.c.b16 %v448, %v446
      %v475 = vpack.c.b16 %v451, %v449
      %v476 = vpack.c.b16 %v452, %v450
      %v477 = vpack.c.b16 %v455, %v453
      %v478 = vpack.c.b16 %v456, %v454
      %v479 = vpack.c.b16 %v459, %v457
      %v480 = vpack.c.b16 %v460, %v458
      %v481 = vpack.c.b16 %v463, %v461
      %v482 = vpack.c.b16 %v464, %v462
      %v483 = vpack.c.b16 %v467, %v465
      %v484 = vpack.c.b16 %v468, %v466
      %501 = vmatpush.bf16.msra.mxu0 %v483
      %502 = vmatpush.bf16.msra.mxu0 %v481
      %503 = vmatpush.bf16.msra.mxu0 %v479
      %504 = vmatpush.bf16.msra.mxu0 %v477
      %505 = vmatpush.bf16.msra.mxu0 %v475
      %506 = vmatpush.bf16.msra.mxu0 %v473
      %507 = vmatpush.bf16.msra.mxu0 %v471
      %508 = vmatpush.bf16.msra.mxu0 %v469
      %509 = vmatmul.bf16.gmra.mxu0 %v404
      %v510 = vpop.f32.mrf.mxu0
      %v511 = vadd.f32 0.0, %v510
      %v512 = vpop.f32.mrf.mxu0
      %513 = vdwg.mxu0
      %514 = vmatpush.bf16.msra.mxu0 %v484
      %515 = vmatpush.bf16.msra.mxu0 %v482
      %516 = vmatpush.bf16.msra.mxu0 %v480
      %517 = vmatpush.bf16.msra.mxu0 %v478
      %518 = vmatpush.bf16.msra.mxu0 %v476
      %519 = vmatpush.bf16.msra.mxu0 %v474
      %520 = vmatpush.bf16.msra.mxu0 %v472
      %521 = vmatpush.bf16.msra.mxu0 %v470
      %522 = vmatmul.bf16.gmra.mxu0 %v404
      %v523 = vpop.f32.mrf.mxu0
      %v524 = vadd.f32 0.0, %v523
      %v525 = vpop.f32.mrf.mxu0
      %526 = vdwg.mxu0
      %p527 = scmp.eq.s32.totalorder %s23, 0
      // Predicated region
      $region53: #{generator_forward.1} parent=51 // pred_check
        %p528 = pneg %p527
      $region54: #{generator_forward.1} parent=51 // pred_check_branch
        %530 = sbr.rel (%p528) target = $region56
      $region55: #{generator_forward.1} parent=51 // pred_region
        %p531 = scmp.eq.s32.totalorder %s24, 0
        // Predicated region
        $region57: #{generator_forward.1} parent=55 // pred_check
          %p532 = pneg %p531
        $region58: #{generator_forward.1} parent=55 // pred_check_branch
          %534 = sbr.rel (%p532) target = $region60
        $region59: #{generator_forward.1} parent=55 // pred_region
          %v535 = vlaneseq
          %vm536 = vcmp.ge.s32.totalorder %v535, 0
          %vm537 = vcmp.lt.s32.totalorder %v535, 256
          %vm538 = vmand %vm536, %vm537
          %539 = vst.msk [vmem:[#allocation2] sm:$0x3] %vm538, 0.0
          %540 = vst.msk [vmem:[#allocation3] sm:$0x3] %vm538, 0.0
        $region60: #{generator_forward.1} parent=55 // pred_fallthru
          _
        %v541 = vld [vmem:[#allocation2] sm:$0x3]
        %v542 = vrot.slane %v511, 4
        %v543 = vadd.f32 %v511, %v542
        %v544 = vrot.slane %v543, 2
        %v545 = vadd.f32 %v543, %v544
        %v546 = vrot.slane %v545, 1
        %v547 = vadd.f32 %v545, %v546
        %v548 = vrot.slane %v524, 4
        %v549 = vadd.f32 %v524, %v548
        %v550 = vrot.slane %v549, 2
        %v551 = vadd.f32 %v549, %v550
        %v552 = vrot.slane %v551, 1
        %v553 = vadd.f32 %v551, %v552
        %v556 = vrot.slane %v553, 7
        %vm557 = vcmask 1040384
        %v558 = vsel %vm557, %v547, %v556
        %v560 = vadd.f32 %v541, %v558
        %v561 = vlaneseq
        %vm562 = vcmp.ge.s32.totalorder %v561, 0
        %vm563 = vcmp.lt.s32.totalorder %v561, 256
        %vm564 = vmand %vm562, %vm563
        %565 = vst.msk [vmem:[#allocation2] sm:$0x3] %vm564, %v560
        %v566 = vld [vmem:[#allocation3] sm:$0x3]
        %v567 = vmul.f32 %v511, %v511
        %v568 = vmul.f32 %v524, %v524
        %v569 = vrot.slane %v567, 4
        %v570 = vadd.f32 %v567, %v569
        %v571 = vrot.slane %v570, 2
        %v572 = vadd.f32 %v570, %v571
        %v573 = vrot.slane %v572, 1
        %v574 = vadd.f32 %v572, %v573
        %v575 = vrot.slane %v568, 4
        %v576 = vadd.f32 %v568, %v575
        %v577 = vrot.slane %v576, 2
        %v578 = vadd.f32 %v576, %v577
        %v579 = vrot.slane %v578, 1
        %v580 = vadd.f32 %v578, %v579
        %v583 = vrot.slane %v580, 7
        %v584 = vsel %vm557, %v574, %v583
        %v586 = vadd.f32 %v566, %v584
        %587 = vst.msk [vmem:[#allocation3] sm:$0x3] %vm564, %v586
      $region56: #{generator_forward.1} parent=51 // pred_fallthru
        _
      %p588 = scmp.eq.s32.totalorder %s23, 1
      // Predicated region
      $region61: #{generator_forward.1} parent=51 // pred_check
        %p589 = pneg %p588
      $region62: #{generator_forward.1} parent=51 // pred_check_branch
        %591 = sbr.rel (%p589) target = $region64
      $region63: #{generator_forward.1} parent=51 // pred_region
        %v592 = vld [vmem:[#allocation2] sm:$0x3]
        %v593 = vmul.f32 %v592, 0.125
        %v594 = vld [vmem:[#allocation3] sm:$0x3]
        %v595 = vmul.f32 %v594, 0.125
        %v596 = vmul.f32 %v593, %v593
        %v597 = vsub.f32 %v595, %v596
        %v598 = vmax.f32 %v597, 0.0
        %v599 = vld [vmem:[%s4] sm:$0x3]
        %v600 = vadd.f32 %v598, 1e-05
        %v601 = vrsqrt.pop %v600
        %v602 = vmul.f32 %v601, %v600
        %v603 = vmul.f32 %v602, %v601
        %v604 = vmul.f32 0.5, %v603
        %v605 = vsub.f32 1.5, %v604
        %v606 = vmul.f32 %v601, %v605
        %vm607 = vweird.f32 %v600
        %vm608 = vweird.f32 %v601
        %vm609 = vmor %vm607, %vm608
        %v610 = vsel %vm609, %v601, %v606
        %v611 = vmul.f32 %v599, %v610
        %v612 = vld [vmem:[%s5] sm:$0x3]
        %v613 = vmul.f32 %v593, %v611
        %v614 = vsub.f32 %v612, %v613
        %v616 = vperm.slane %v611, 0
        %v617 = vperm.slane %v611, 1
        %v620 = vmul.f32 %v511, %v616
        %v621 = vmul.f32 %v524, %v617
        %v623 = vperm.slane %v614, 0
        %v624 = vperm.slane %v614, 1
        %v627 = vadd.f32 %v620, %v623
        %v628 = vadd.f32 %v621, %v624
        %v629 = vmul.f32 %v627, 0.2
        %v630 = vmul.f32 %v628, 0.2
        %v631 = vmax.f32 %v627, %v629
        %v632 = vmax.f32 %v628, %v630
        %v633 = vpack.c.bf16 %v631, %v631
        %v634 = vpack.c.bf16 %v632, %v632
        %v635 = vld [vmem:[%s6] sm:$0xff]
        %v636 = vld [vmem:[%s6 + $0x8] sm:$0xff]
        %v637 = vld [vmem:[%s6 + $0x10] sm:$0xff]
        %v638 = vld [vmem:[%s6 + $0x18] sm:$0xf]
        %v639 = vld [vmem:[%s6 + $0x1c] sm:$0xff]
        %v640 = vld [vmem:[%s6 + $0x24] sm:$0xff]
        %v641 = vld [vmem:[%s6 + $0x2c] sm:$0xff]
        %v642 = vld [vmem:[%s6 + $0x34] sm:$0xf]
        %v643 = vld [vmem:[%s6 + $0x38] sm:$0xff]
        %v644 = vld [vmem:[%s6 + $0x40] sm:$0xff]
        %v645 = vld [vmem:[%s6 + $0x48] sm:$0xff]
        %v646 = vld [vmem:[%s6 + $0x50] sm:$0xf]
        %v647 = vld [vmem:[%s6 + $0x54] sm:$0xff]
        %v648 = vld [vmem:[%s6 + $0x5c] sm:$0xff]
        %v649 = vld [vmem:[%s6 + $0x64] sm:$0xff]
        %v650 = vld [vmem:[%s6 + $0x6c] sm:$0xf]
        %v651 = vld [vmem:[%s6 + $0x70] sm:$0xff]
        %v652 = vld [vmem:[%s6 + $0x78] sm:$0xff]
        %v653 = vld [vmem:[%s6 + $0x80] sm:$0xff]
        %v654 = vld [vmem:[%s6 + $0x88] sm:$0xf]
        %v655 = vld [vmem:[%s6 + $0x8c] sm:$0xff]
        %v656 = vld [vmem:[%s6 + $0x94] sm:$0xff]
        %v657 = vld [vmem:[%s6 + $0x9c] sm:$0xff]
        %v658 = vld [vmem:[%s6 + $0xa4] sm:$0xf]
        %v659 = vld [vmem:[%s6 + $0xa8] sm:$0xff]
        %v660 = vld [vmem:[%s6 + $0xb0] sm:$0xff]
        %v661 = vld [vmem:[%s6 + $0xb8] sm:$0xff]
        %v662 = vld [vmem:[%s6 + $0xc0] sm:$0xf]
        %v663 = vld [vmem:[%s6 + $0xc4] sm:$0xff]
        %v664 = vld [vmem:[%s6 + $0xcc] sm:$0xff]
        %v665 = vld [vmem:[%s6 + $0xd4] sm:$0xff]
        %v666 = vld [vmem:[%s6 + $0xdc] sm:$0xf]
        %v667 = vld [vmem:[%s6 + $0xe0] sm:$0xff]
        %v668 = vld [vmem:[%s6 + $0xe8] sm:$0xff]
        %v669 = vld [vmem:[%s6 + $0xf0] sm:$0xff]
        %v670 = vld [vmem:[%s6 + $0xf8] sm:$0xf]
        %v671 = vld [vmem:[%s6 + $0xfc] sm:$0xff]
        %v672 = vld [vmem:[%s6 + $0x104] sm:$0xff]
        %v673 = vld [vmem:[%s6 + $0x10c] sm:$0xff]
        %v674 = vld [vmem:[%s6 + $0x114] sm:$0xf]
        %v675 = vld [vmem:[%s6 + $0x118] sm:$0xff]
        %v676 = vld [vmem:[%s6 + $0x120] sm:$0xff]
        %v677 = vld [vmem:[%s6 + $0x128] sm:$0xff]
        %v678 = vld [vmem:[%s6 + $0x130] sm:$0xf]
        %v679 = vld [vmem:[%s6 + $0x134] sm:$0xff]
        %v680 = vld [vmem:[%s6 + $0x13c] sm:$0xff]
        %v681 = vld [vmem:[%s6 + $0x144] sm:$0xff]
        %v682 = vld [vmem:[%s6 + $0x14c] sm:$0xf]
        %v683 = vld [vmem:[%s6 + $0x150] sm:$0xff]
        %v684 = vld [vmem:[%s6 + $0x158] sm:$0xff]
        %v685 = vld [vmem:[%s6 + $0x160] sm:$0xff]
        %v686 = vld [vmem:[%s6 + $0x168] sm:$0xf]
        %v687 = vld [vmem:[%s6 + $0x16c] sm:$0xff]
        %v688 = vld [vmem:[%s6 + $0x174] sm:$0xff]
        %v689 = vld [vmem:[%s6 + $0x17c] sm:$0xff]
        %v690 = vld [vmem:[%s6 + $0x184] sm:$0xf]
        %v691 = vld [vmem:[%s6 + $0x188] sm:$0xff]
        %v692 = vld [vmem:[%s6 + $0x190] sm:$0xff]
        %v693 = vld [vmem:[%s6 + $0x198] sm:$0xff]
        %v694 = vld [vmem:[%s6 + $0x1a0] sm:$0xf]
        %v695 = vld [vmem:[%s6 + $0x1a4] sm:$0xff]
        %v696 = vld [vmem:[%s6 + $0x1ac] sm:$0xff]
        %v697 = vld [vmem:[%s6 + $0x1b4] sm:$0xff]
        %v698 = vld [vmem:[%s6 + $0x1bc] sm:$0xf]
        %v699 = vld [vmem:[%s6 + $0x1c0] sm:$0xff]
        %v700 = vld [vmem:[%s6 + $0x1c8] sm:$0xff]
        %v701 = vld [vmem:[%s6 + $0x1d0] sm:$0xff]
        %v702 = vld [vmem:[%s6 + $0x1d8] sm:$0xf]
        %v703 = vld [vmem:[%s6 + $0x1dc] sm:$0xff]
        %v704 = vld [vmem:[%s6 + $0x1e4] sm:$0xff]
        %v705 = vld [vmem:[%s6 + $0x1ec] sm:$0xff]
        %v706 = vld [vmem:[%s6 + $0x1f4] sm:$0xf]
        %v707 = vld [vmem:[%s6 + $0x1f8] sm:$0xff]
        %v708 = vld [vmem:[%s6 + $0x200] sm:$0xff]
        %v709 = vld [vmem:[%s6 + $0x208] sm:$0xff]
        %v710 = vld [vmem:[%s6 + $0x210] sm:$0xf]
        %v711 = vld [vmem:[%s6 + $0x214] sm:$0xff]
        %v712 = vld [vmem:[%s6 + $0x21c] sm:$0xff]
        %v713 = vld [vmem:[%s6 + $0x224] sm:$0xff]
        %v714 = vld [vmem:[%s6 + $0x22c] sm:$0xf]
        %v715 = vld [vmem:[%s6 + $0x230] sm:$0xff]
        %v716 = vld [vmem:[%s6 + $0x238] sm:$0xff]
        %v717 = vld [vmem:[%s6 + $0x240] sm:$0xff]
        %v718 = vld [vmem:[%s6 + $0x248] sm:$0xf]
        %v719 = vld [vmem:[%s6 + $0x24c] sm:$0xff]
        %v720 = vld [vmem:[%s6 + $0x254] sm:$0xff]
        %v721 = vld [vmem:[%s6 + $0x25c] sm:$0xff]
        %v722 = vld [vmem:[%s6 + $0x264] sm:$0xf]
        %v723 = vld [vmem:[%s6 + $0x268] sm:$0xff]
        %v724 = vld [vmem:[%s6 + $0x270] sm:$0xff]
        %v725 = vld [vmem:[%s6 + $0x278] sm:$0xff]
        %v726 = vld [vmem:[%s6 + $0x280] sm:$0xf]
        %v727 = vld [vmem:[%s6 + $0x284] sm:$0xff]
        %v728 = vld [vmem:[%s6 + $0x28c] sm:$0xff]
        %v729 = vld [vmem:[%s6 + $0x294] sm:$0xff]
        %v730 = vld [vmem:[%s6 + $0x29c] sm:$0xf]
        %v731 = vld [vmem:[%s6 + $0x2a0] sm:$0xff]
        %v732 = vld [vmem:[%s6 + $0x2a8] sm:$0xff]
        %v733 = vld [vmem:[%s6 + $0x2b0] sm:$0xff]
        %v734 = vld [vmem:[%s6 + $0x2b8] sm:$0xf]
        %v735 = vld [vmem:[%s6 + $0x2bc] sm:$0xff]
        %v736 = vld [vmem:[%s6 + $0x2c4] sm:$0xff]
        %v737 = vld [vmem:[%s6 + $0x2cc] sm:$0xff]
        %v738 = vld [vmem:[%s6 + $0x2d4] sm:$0xf]
        %v739 = vld [vmem:[%s6 + $0x2d8] sm:$0xff]
        %v740 = vld [vmem:[%s6 + $0x2e0] sm:$0xff]
        %v741 = vld [vmem:[%s6 + $0x2e8] sm:$0xff]
        %v742 = vld [vmem:[%s6 + $0x2f0] sm:$0xf]
        %v743 = vld [vmem:[%s6 + $0x2f4] sm:$0xff]
        %v744 = vld [vmem:[%s6 + $0x2fc] sm:$0xff]
        %v745 = vld [vmem:[%s6 + $0x304] sm:$0xff]
        %v746 = vld [vmem:[%s6 + $0x30c] sm:$0xf]
        %v747 = vld [vmem:[%s6 + $0x310] sm:$0xff]
        %v748 = vld [vmem:[%s6 + $0x318] sm:$0xff]
        %v749 = vld [vmem:[%s6 + $0x320] sm:$0xff]
        %v750 = vld [vmem:[%s6 + $0x328] sm:$0xf]
        %v751 = vld [vmem:[%s6 + $0x32c] sm:$0xff]
        %v752 = vld [vmem:[%s6 + $0x334] sm:$0xff]
        %v753 = vld [vmem:[%s6 + $0x33c] sm:$0xff]
        %v754 = vld [vmem:[%s6 + $0x344] sm:$0xf]
        %v755 = vld [vmem:[%s6 + $0x348] sm:$0xff]
        %v756 = vld [vmem:[%s6 + $0x350] sm:$0xff]
        %v757 = vld [vmem:[%s6 + $0x358] sm:$0xff]
        %v758 = vld [vmem:[%s6 + $0x360] sm:$0xf]
        %v759 = vld [vmem:[%s6 + $0x364] sm:$0xff]
        %v760 = vld [vmem:[%s6 + $0x36c] sm:$0xff]
        %v761 = vld [vmem:[%s6 + $0x374] sm:$0xff]
        %v762 = vld [vmem:[%s6 + $0x37c] sm:$0xf]
        %v763 = vld [vmem:[%s7] sm:$0x7f]
        %v765 = vperm.slane %v763, 0
        %v766 = vperm.slane %v763, 1
        %v767 = vperm.slane %v763, 2
        %v768 = vperm.slane %v763, 3
        %v769 = vperm.slane %v763, 4
        %v770 = vperm.slane %v763, 5
        %v771 = vperm.slane %v763, 6
        %v907 = vunpack.c.l.b16 %v635
        %v908 = vunpack.c.h.b16 %v635
        %v909 = vunpack.c.l.b16 %v636
        %v910 = vunpack.c.h.b16 %v636
        %v911 = vunpack.c.l.b16 %v637
        %v912 = vunpack.c.h.b16 %v637
        %v913 = vunpack.c.l.b16 %v638
        %v914 = vunpack.c.l.b16 %v639
        %v915 = vunpack.c.h.b16 %v639
        %v916 = vunpack.c.l.b16 %v640
        %v917 = vunpack.c.h.b16 %v640
        %v918 = vunpack.c.l.b16 %v641
        %v919 = vunpack.c.h.b16 %v641
        %v920 = vunpack.c.l.b16 %v642
        %v921 = vunpack.c.l.b16 %v643
        %v922 = vunpack.c.h.b16 %v643
        %v923 = vunpack.c.l.b16 %v644
        %v924 = vunpack.c.h.b16 %v644
        %v925 = vunpack.c.l.b16 %v645
        %v926 = vunpack.c.h.b16 %v645
        %v927 = vunpack.c.l.b16 %v646
        %v928 = vunpack.c.l.b16 %v647
        %v929 = vunpack.c.h.b16 %v647
        %v930 = vunpack.c.l.b16 %v648
        %v931 = vunpack.c.h.b16 %v648
        %v932 = vunpack.c.l.b16 %v649
        %v933 = vunpack.c.h.b16 %v649
        %v934 = vunpack.c.l.b16 %v650
        %v935 = vunpack.c.l.b16 %v651
        %v936 = vunpack.c.h.b16 %v651
        %v937 = vunpack.c.l.b16 %v652
        %v938 = vunpack.c.h.b16 %v652
        %v939 = vunpack.c.l.b16 %v653
        %v940 = vunpack.c.h.b16 %v653
        %v941 = vunpack.c.l.b16 %v654
        %v942 = vunpack.c.l.b16 %v655
        %v943 = vunpack.c.h.b16 %v655
        %v944 = vunpack.c.l.b16 %v656
        %v945 = vunpack.c.h.b16 %v656
        %v946 = vunpack.c.l.b16 %v657
        %v947 = vunpack.c.h.b16 %v657
        %v948 = vunpack.c.l.b16 %v658
        %v949 = vunpack.c.l.b16 %v659
        %v950 = vunpack.c.h.b16 %v659
        %v951 = vunpack.c.l.b16 %v660
        %v952 = vunpack.c.h.b16 %v660
        %v953 = vunpack.c.l.b16 %v661
        %v954 = vunpack.c.h.b16 %v661
        %v955 = vunpack.c.l.b16 %v662
        %v956 = vunpack.c.l.b16 %v663
        %v957 = vunpack.c.h.b16 %v663
        %v958 = vunpack.c.l.b16 %v664
        %v959 = vunpack.c.h.b16 %v664
        %v960 = vunpack.c.l.b16 %v665
        %v961 = vunpack.c.h.b16 %v665
        %v962 = vunpack.c.l.b16 %v666
        %v963 = vunpack.c.l.b16 %v667
        %v964 = vunpack.c.h.b16 %v667
        %v965 = vunpack.c.l.b16 %v668
        %v966 = vunpack.c.h.b16 %v668
        %v967 = vunpack.c.l.b16 %v669
        %v968 = vunpack.c.h.b16 %v669
        %v969 = vunpack.c.l.b16 %v670
        %v970 = vunpack.c.l.b16 %v671
        %v971 = vunpack.c.h.b16 %v671
        %v972 = vunpack.c.l.b16 %v672
        %v973 = vunpack.c.h.b16 %v672
        %v974 = vunpack.c.l.b16 %v673
        %v975 = vunpack.c.h.b16 %v673
        %v976 = vunpack.c.l.b16 %v674
        %v977 = vunpack.c.l.b16 %v675
        %v978 = vunpack.c.h.b16 %v675
        %v979 = vunpack.c.l.b16 %v676
        %v980 = vunpack.c.h.b16 %v676
        %v981 = vunpack.c.l.b16 %v677
        %v982 = vunpack.c.h.b16 %v677
        %v983 = vunpack.c.l.b16 %v678
        %v984 = vunpack.c.l.b16 %v679
        %v985 = vunpack.c.h.b16 %v679
        %v986 = vunpack.c.l.b16 %v680
        %v987 = vunpack.c.h.b16 %v680
        %v988 = vunpack.c.l.b16 %v681
        %v989 = vunpack.c.h.b16 %v681
        %v990 = vunpack.c.l.b16 %v682
        %v991 = vunpack.c.l.b16 %v683
        %v992 = vunpack.c.h.b16 %v683
        %v993 = vunpack.c.l.b16 %v684
        %v994 = vunpack.c.h.b16 %v684
        %v995 = vunpack.c.l.b16 %v685
        %v996 = vunpack.c.h.b16 %v685
        %v997 = vunpack.c.l.b16 %v686
        %v998 = vunpack.c.l.b16 %v687
        %v999 = vunpack.c.h.b16 %v687
        %v1000 = vunpack.c.l.b16 %v688
        %v1001 = vunpack.c.h.b16 %v688
        %v1002 = vunpack.c.l.b16 %v689
        %v1003 = vunpack.c.h.b16 %v689
        %v1004 = vunpack.c.l.b16 %v690
        %v1005 = vunpack.c.l.b16 %v691
        %v1006 = vunpack.c.h.b16 %v691
        %v1007 = vunpack.c.l.b16 %v692
        %v1008 = vunpack.c.h.b16 %v692
        %v1009 = vunpack.c.l.b16 %v693
        %v1010 = vunpack.c.h.b16 %v693
        %v1011 = vunpack.c.l.b16 %v694
        %v1012 = vunpack.c.l.b16 %v695
        %v1013 = vunpack.c.h.b16 %v695
        %v1014 = vunpack.c.l.b16 %v696
        %v1015 = vunpack.c.h.b16 %v696
        %v1016 = vunpack.c.l.b16 %v697
        %v1017 = vunpack.c.h.b16 %v697
        %v1018 = vunpack.c.l.b16 %v698
        %v1019 = vunpack.c.l.b16 %v699
        %v1020 = vunpack.c.h.b16 %v699
        %v1021 = vunpack.c.l.b16 %v700
        %v1022 = vunpack.c.h.b16 %v700
        %v1023 = vunpack.c.l.b16 %v701
        %v1024 = vunpack.c.h.b16 %v701
        %v1025 = vunpack.c.l.b16 %v702
        %v1026 = vunpack.c.l.b16 %v703
        %v1027 = vunpack.c.h.b16 %v703
        %v1028 = vunpack.c.l.b16 %v704
        %v1029 = vunpack.c.h.b16 %v704
        %v1030 = vunpack.c.l.b16 %v705
        %v1031 = vunpack.c.h.b16 %v705
        %v1032 = vunpack.c.l.b16 %v706
        %v1033 = vunpack.c.l.b16 %v707
        %v1034 = vunpack.c.h.b16 %v707
        %v1035 = vunpack.c.l.b16 %v708
        %v1036 = vunpack.c.h.b16 %v708
        %v1037 = vunpack.c.l.b16 %v709
        %v1038 = vunpack.c.h.b16 %v709
        %v1039 = vunpack.c.l.b16 %v710
        %v1040 = vunpack.c.l.b16 %v711
        %v1041 = vunpack.c.h.b16 %v711
        %v1042 = vunpack.c.l.b16 %v712
        %v1043 = vunpack.c.h.b16 %v712
        %v1044 = vunpack.c.l.b16 %v713
        %v1045 = vunpack.c.h.b16 %v713
        %v1046 = vunpack.c.l.b16 %v714
        %v1047 = vunpack.c.l.b16 %v715
        %v1048 = vunpack.c.h.b16 %v715
        %v1049 = vunpack.c.l.b16 %v716
        %v1050 = vunpack.c.h.b16 %v716
        %v1051 = vunpack.c.l.b16 %v717
        %v1052 = vunpack.c.h.b16 %v717
        %v1053 = vunpack.c.l.b16 %v718
        %v1054 = vunpack.c.l.b16 %v719
        %v1055 = vunpack.c.h.b16 %v719
        %v1056 = vunpack.c.l.b16 %v720
        %v1057 = vunpack.c.h.b16 %v720
        %v1058 = vunpack.c.l.b16 %v721
        %v1059 = vunpack.c.h.b16 %v721
        %v1060 = vunpack.c.l.b16 %v722
        %v1061 = vunpack.c.l.b16 %v723
        %v1062 = vunpack.c.h.b16 %v723
        %v1063 = vunpack.c.l.b16 %v724
        %v1064 = vunpack.c.h.b16 %v724
        %v1065 = vunpack.c.l.b16 %v725
        %v1066 = vunpack.c.h.b16 %v725
        %v1067 = vunpack.c.l.b16 %v726
        %v1068 = vunpack.c.l.b16 %v727
        %v1069 = vunpack.c.h.b16 %v727
        %v1070 = vunpack.c.l.b16 %v728
        %v1071 = vunpack.c.h.b16 %v728
        %v1072 = vunpack.c.l.b16 %v729
        %v1073 = vunpack.c.h.b16 %v729
        %v1074 = vunpack.c.l.b16 %v730
        %v1075 = vunpack.c.l.b16 %v731
        %v1076 = vunpack.c.h.b16 %v731
        %v1077 = vunpack.c.l.b16 %v732
        %v1078 = vunpack.c.h.b16 %v732
        %v1079 = vunpack.c.l.b16 %v733
        %v1080 = vunpack.c.h.b16 %v733
        %v1081 = vunpack.c.l.b16 %v734
        %v1082 = vunpack.c.l.b16 %v735
        %v1083 = vunpack.c.h.b16 %v735
        %v1084 = vunpack.c.l.b16 %v736
        %v1085 = vunpack.c.h.b16 %v736
        %v1086 = vunpack.c.l.b16 %v737
        %v1087 = vunpack.c.h.b16 %v737
        %v1088 = vunpack.c.l.b16 %v738
        %v1089 = vunpack.c.l.b16 %v739
        %v1090 = vunpack.c.h.b16 %v739
        %v1091 = vunpack.c.l.b16 %v740
        %v1092 = vunpack.c.h.b16 %v740
        %v1093 = vunpack.c.l.b16 %v741
        %v1094 = vunpack.c.h.b16 %v741
        %v1095 = vunpack.c.l.b16 %v742
        %v1096 = vunpack.c.l.b16 %v743
        %v1097 = vunpack.c.h.b16 %v743
        %v1098 = vunpack.c.l.b16 %v744
        %v1099 = vunpack.c.h.b16 %v744
        %v1100 = vunpack.c.l.b16 %v745
        %v1101 = vunpack.c.h.b16 %v745
        %v1102 = vunpack.c.l.b16 %v746
        %v1103 = vunpack.c.l.b16 %v747
        %v1104 = vunpack.c.h.b16 %v747
        %v1105 = vunpack.c.l.b16 %v748
        %v1106 = vunpack.c.h.b16 %v748
        %v1107 = vunpack.c.l.b16 %v749
        %v1108 = vunpack.c.h.b16 %v749
        %v1109 = vunpack.c.l.b16 %v750
        %v1110 = vunpack.c.l.b16 %v751
        %v1111 = vunpack.c.h.b16 %v751
        %v1112 = vunpack.c.l.b16 %v752
        %v1113 = vunpack.c.h.b16 %v752
        %v1114 = vunpack.c.l.b16 %v753
        %v1115 = vunpack.c.h.b16 %v753
        %v1116 = vunpack.c.l.b16 %v754
        %v1117 = vunpack.c.l.b16 %v755
        %v1118 = vunpack.c.h.b16 %v755
        %v1119 = vunpack.c.l.b16 %v756
        %v1120 = vunpack.c.h.b16 %v756
        %v1121 = vunpack.c.l.b16 %v757
        %v1122 = vunpack.c.h.b16 %v757
        %v1123 = vunpack.c.l.b16 %v758
        %v1124 = vunpack.c.l.b16 %v759
        %v1125 = vunpack.c.h.b16 %v759
        %v1126 = vunpack.c.l.b16 %v760
        %v1127 = vunpack.c.h.b16 %v760
        %v1128 = vunpack.c.l.b16 %v761
        %v1129 = vunpack.c.h.b16 %v761
        %v1130 = vunpack.c.l.b16 %v762
        %v1131 = vpack.c.b16 %v914, %v907
        %v1132 = vpack.c.b16 %v915, %v908
        %v1133 = vpack.c.b16 %v916, %v909
        %v1134 = vpack.c.b16 %v917, %v910
        %v1135 = vpack.c.b16 %v918, %v911
        %v1136 = vpack.c.b16 %v919, %v912
        %v1137 = vpack.c.b16 %v920, %v913
        %v1138 = vpack.c.b16 %v928, %v921
        %v1139 = vpack.c.b16 %v929, %v922
        %v1140 = vpack.c.b16 %v930, %v923
        %v1141 = vpack.c.b16 %v931, %v924
        %v1142 = vpack.c.b16 %v932, %v925
        %v1143 = vpack.c.b16 %v933, %v926
        %v1144 = vpack.c.b16 %v934, %v927
        %v1145 = vpack.c.b16 %v942, %v935
        %v1146 = vpack.c.b16 %v943, %v936
        %v1147 = vpack.c.b16 %v944, %v937
        %v1148 = vpack.c.b16 %v945, %v938
        %v1149 = vpack.c.b16 %v946, %v939
        %v1150 = vpack.c.b16 %v947, %v940
        %v1151 = vpack.c.b16 %v948, %v941
        %v1152 = vpack.c.b16 %v956, %v949
        %v1153 = vpack.c.b16 %v957, %v950
        %v1154 = vpack.c.b16 %v958, %v951
        %v1155 = vpack.c.b16 %v959, %v952
        %v1156 = vpack.c.b16 %v960, %v953
        %v1157 = vpack.c.b16 %v961, %v954
        %v1158 = vpack.c.b16 %v962, %v955
        %v1159 = vpack.c.b16 %v970, %v963
        %v1160 = vpack.c.b16 %v971, %v964
        %v1161 = vpack.c.b16 %v972, %v965
        %v1162 = vpack.c.b16 %v973, %v966
        %v1163 = vpack.c.b16 %v974, %v967
        %v1164 = vpack.c.b16 %v975, %v968
        %v1165 = vpack.c.b16 %v976, %v969
        %v1166 = vpack.c.b16 %v984, %v977
        %v1167 = vpack.c.b16 %v985, %v978
        %v1168 = vpack.c.b16 %v986, %v979
        %v1169 = vpack.c.b16 %v987, %v980
        %v1170 = vpack.c.b16 %v988, %v981
        %v1171 = vpack.c.b16 %v989, %v982
        %v1172 = vpack.c.b16 %v990, %v983
        %v1173 = vpack.c.b16 %v998, %v991
        %v1174 = vpack.c.b16 %v999, %v992
        %v1175 = vpack.c.b16 %v1000, %v993
        %v1176 = vpack.c.b16 %v1001, %v994
        %v1177 = vpack.c.b16 %v1002, %v995
        %v1178 = vpack.c.b16 %v1003, %v996
        %v1179 = vpack.c.b16 %v1004, %v997
        %v1180 = vpack.c.b16 %v1012, %v1005
        %v1181 = vpack.c.b16 %v1013, %v1006
        %v1182 = vpack.c.b16 %v1014, %v1007
        %v1183 = vpack.c.b16 %v1015, %v1008
        %v1184 = vpack.c.b16 %v1016, %v1009
        %v1185 = vpack.c.b16 %v1017, %v1010
        %v1186 = vpack.c.b16 %v1018, %v1011
        %v1187 = vpack.c.b16 %v1026, %v1019
        %v1188 = vpack.c.b16 %v1027, %v1020
        %v1189 = vpack.c.b16 %v1028, %v1021
        %v1190 = vpack.c.b16 %v1029, %v1022
        %v1191 = vpack.c.b16 %v1030, %v1023
        %v1192 = vpack.c.b16 %v1031, %v1024
        %v1193 = vpack.c.b16 %v1032, %v1025
        %v1194 = vpack.c.b16 %v1040, %v1033
        %v1195 = vpack.c.b16 %v1041, %v1034
        %v1196 = vpack.c.b16 %v1042, %v1035
        %v1197 = vpack.c.b16 %v1043, %v1036
        %v1198 = vpack.c.b16 %v1044, %v1037
        %v1199 = vpack.c.b16 %v1045, %v1038
        %v1200 = vpack.c.b16 %v1046, %v1039
        %v1201 = vpack.c.b16 %v1054, %v1047
        %v1202 = vpack.c.b16 %v1055, %v1048
        %v1203 = vpack.c.b16 %v1056, %v1049
        %v1204 = vpack.c.b16 %v1057, %v1050
        %v1205 = vpack.c.b16 %v1058, %v1051
        %v1206 = vpack.c.b16 %v1059, %v1052
        %v1207 = vpack.c.b16 %v1060, %v1053
        %v1208 = vpack.c.b16 %v1068, %v1061
        %v1209 = vpack.c.b16 %v1069, %v1062
        %v1210 = vpack.c.b16 %v1070, %v1063
        %v1211 = vpack.c.b16 %v1071, %v1064
        %v1212 = vpack.c.b16 %v1072, %v1065
        %v1213 = vpack.c.b16 %v1073, %v1066
        %v1214 = vpack.c.b16 %v1074, %v1067
        %v1215 = vpack.c.b16 %v1082, %v1075
        %v1216 = vpack.c.b16 %v1083, %v1076
        %v1217 = vpack.c.b16 %v1084, %v1077
        %v1218 = vpack.c.b16 %v1085, %v1078
        %v1219 = vpack.c.b16 %v1086, %v1079
        %v1220 = vpack.c.b16 %v1087, %v1080
        %v1221 = vpack.c.b16 %v1088, %v1081
        %v1222 = vpack.c.b16 %v1096, %v1089
        %v1223 = vpack.c.b16 %v1097, %v1090
        %v1224 = vpack.c.b16 %v1098, %v1091
        %v1225 = vpack.c.b16 %v1099, %v1092
        %v1226 = vpack.c.b16 %v1100, %v1093
        %v1227 = vpack.c.b16 %v1101, %v1094
        %v1228 = vpack.c.b16 %v1102, %v1095
        %v1229 = vpack.c.b16 %v1110, %v1103
        %v1230 = vpack.c.b16 %v1111, %v1104
        %v1231 = vpack.c.b16 %v1112, %v1105
        %v1232 = vpack.c.b16 %v1113, %v1106
        %v1233 = vpack.c.b16 %v1114, %v1107
        %v1234 = vpack.c.b16 %v1115, %v1108
        %v1235 = vpack.c.b16 %v1116, %v1109
        %v1236 = vpack.c.b16 %v1124, %v1117
        %v1237 = vpack.c.b16 %v1125, %v1118
        %v1238 = vpack.c.b16 %v1126, %v1119
        %v1239 = vpack.c.b16 %v1127, %v1120
        %v1240 = vpack.c.b16 %v1128, %v1121
        %v1241 = vpack.c.b16 %v1129, %v1122
        %v1242 = vpack.c.b16 %v1130, %v1123
        %1355 = vmatpush.bf16.msra.mxu0 %v1180
        %1356 = vmatpush.bf16.msra.mxu0 %v1173
        %1357 = vmatpush.bf16.msra.mxu0 %v1166
        %1358 = vmatpush.bf16.msra.mxu0 %v1159
        %1359 = vmatpush.bf16.msra.mxu0 %v1152
        %1360 = vmatpush.bf16.msra.mxu0 %v1145
        %1361 = vmatpush.bf16.msra.mxu0 %v1138
        %1362 = vmatpush.bf16.msra.mxu0 %v1131
        %1363 = vmatmul.bf16.gmra.mxu0 %v633
        %v1364 = vpop.f32.mrf.mxu0
        %v1365 = vadd.f32 %v765, %v1364
        %v1366 = vpop.f32.mrf.mxu0
        %1367 = vdwg.mxu0
        %1368 = vmatpush.bf16.msra.mxu0 %v1236
        %1369 = vmatpush.bf16.msra.mxu0 %v1229
        %1370 = vmatpush.bf16.msra.mxu0 %v1222
        %1371 = vmatpush.bf16.msra.mxu0 %v1215
        %1372 = vmatpush.bf16.msra.mxu0 %v1208
        %1373 = vmatpush.bf16.msra.mxu0 %v1201
        %1374 = vmatpush.bf16.msra.mxu0 %v1194
        %1375 = vmatpush.bf16.msra.mxu0 %v1187
        %1376 = vmatmul.bf16.gmra.mxu0 %v634
        %v1377 = vpop.f32.mrf.mxu0
        %v1378 = vadd.f32 %v1365, %v1377
        %v1379 = vpop.f32.mrf.mxu0
        %1380 = vdwg.mxu0
        %1381 = vmatpush.bf16.msra.mxu0 %v1181
        %1382 = vmatpush.bf16.msra.mxu0 %v1174
        %1383 = vmatpush.bf16.msra.mxu0 %v1167
        %1384 = vmatpush.bf16.msra.mxu0 %v1160
        %1385 = vmatpush.bf16.msra.mxu0 %v1153
        %1386 = vmatpush.bf16.msra.mxu0 %v1146
        %1387 = vmatpush.bf16.msra.mxu0 %v1139
        %1388 = vmatpush.bf16.msra.mxu0 %v1132
        %1389 = vmatmul.bf16.gmra.mxu0 %v633
        %v1390 = vpop.f32.mrf.mxu0
        %v1391 = vadd.f32 %v766, %v1390
        %v1392 = vpop.f32.mrf.mxu0
        %1393 = vdwg.mxu0
        %1394 = vmatpush.bf16.msra.mxu0 %v1237
        %1395 = vmatpush.bf16.msra.mxu0 %v1230
        %1396 = vmatpush.bf16.msra.mxu0 %v1223
        %1397 = vmatpush.bf16.msra.mxu0 %v1216
        %1398 = vmatpush.bf16.msra.mxu0 %v1209
        %1399 = vmatpush.bf16.msra.mxu0 %v1202
        %1400 = vmatpush.bf16.msra.mxu0 %v1195
        %1401 = vmatpush.bf16.msra.mxu0 %v1188
        %1402 = vmatmul.bf16.gmra.mxu0 %v634
        %v1403 = vpop.f32.mrf.mxu0
        %v1404 = vadd.f32 %v1391, %v1403
        %v1405 = vpop.f32.mrf.mxu0
        %1406 = vdwg.mxu0
        %1407 = vmatpush.bf16.msra.mxu0 %v1182
        %1408 = vmatpush.bf16.msra.mxu0 %v1175
        %1409 = vmatpush.bf16.msra.mxu0 %v1168
        %1410 = vmatpush.bf16.msra.mxu0 %v1161
        %1411 = vmatpush.bf16.msra.mxu0 %v1154
        %1412 = vmatpush.bf16.msra.mxu0 %v1147
        %1413 = vmatpush.bf16.msra.mxu0 %v1140
        %1414 = vmatpush.bf16.msra.mxu0 %v1133
        %1415 = vmatmul.bf16.gmra.mxu0 %v633
        %v1416 = vpop.f32.mrf.mxu0
        %v1417 = vadd.f32 %v767, %v1416
        %v1418 = vpop.f32.mrf.mxu0
        %1419 = vdwg.mxu0
        %1420 = vmatpush.bf16.msra.mxu0 %v1238
        %1421 = vmatpush.bf16.msra.mxu0 %v1231
        %1422 = vmatpush.bf16.msra.mxu0 %v1224
        %1423 = vmatpush.bf16.msra.mxu0 %v1217
        %1424 = vmatpush.bf16.msra.mxu0 %v1210
        %1425 = vmatpush.bf16.msra.mxu0 %v1203
        %1426 = vmatpush.bf16.msra.mxu0 %v1196
        %1427 = vmatpush.bf16.msra.mxu0 %v1189
        %1428 = vmatmul.bf16.gmra.mxu0 %v634
        %v1429 = vpop.f32.mrf.mxu0
        %v1430 = vadd.f32 %v1417, %v1429
        %v1431 = vpop.f32.mrf.mxu0
        %1432 = vdwg.mxu0
        %1433 = vmatpush.bf16.msra.mxu0 %v1183
        %1434 = vmatpush.bf16.msra.mxu0 %v1176
        %1435 = vmatpush.bf16.msra.mxu0 %v1169
        %1436 = vmatpush.bf16.msra.mxu0 %v1162
        %1437 = vmatpush.bf16.msra.mxu0 %v1155
        %1438 = vmatpush.bf16.msra.mxu0 %v1148
        %1439 = vmatpush.bf16.msra.mxu0 %v1141
        %1440 = vmatpush.bf16.msra.mxu0 %v1134
        %1441 = vmatmul.bf16.gmra.mxu0 %v633
        %v1442 = vpop.f32.mrf.mxu0
        %v1443 = vadd.f32 %v768, %v1442
        %v1444 = vpop.f32.mrf.mxu0
        %1445 = vdwg.mxu0
        %1446 = vmatpush.bf16.msra.mxu0 %v1239
        %1447 = vmatpush.bf16.msra.mxu0 %v1232
        %1448 = vmatpush.bf16.msra.mxu0 %v1225
        %1449 = vmatpush.bf16.msra.mxu0 %v1218
        %1450 = vmatpush.bf16.msra.mxu0 %v1211
        %1451 = vmatpush.bf16.msra.mxu0 %v1204
        %1452 = vmatpush.bf16.msra.mxu0 %v1197
        %1453 = vmatpush.bf16.msra.mxu0 %v1190
        %1454 = vmatmul.bf16.gmra.mxu0 %v634
        %v1455 = vpop.f32.mrf.mxu0
        %v1456 = vadd.f32 %v1443, %v1455
        %v1457 = vpop.f32.mrf.mxu0
        %1458 = vdwg.mxu0
        %1459 = vmatpush.bf16.msra.mxu0 %v1184
        %1460 = vmatpush.bf16.msra.mxu0 %v1177
        %1461 = vmatpush.bf16.msra.mxu0 %v1170
        %1462 = vmatpush.bf16.msra.mxu0 %v1163
        %1463 = vmatpush.bf16.msra.mxu0 %v1156
        %1464 = vmatpush.bf16.msra.mxu0 %v1149
        %1465 = vmatpush.bf16.msra.mxu0 %v1142
        %1466 = vmatpush.bf16.msra.mxu0 %v1135
        %1467 = vmatmul.bf16.gmra.mxu0 %v633
        %v1468 = vpop.f32.mrf.mxu0
        %v1469 = vadd.f32 %v769, %v1468
        %v1470 = vpop.f32.mrf.mxu0
        %1471 = vdwg.mxu0
        %1472 = vmatpush.bf16.msra.mxu0 %v1240
        %1473 = vmatpush.bf16.msra.mxu0 %v1233
        %1474 = vmatpush.bf16.msra.mxu0 %v1226
        %1475 = vmatpush.bf16.msra.mxu0 %v1219
        %1476 = vmatpush.bf16.msra.mxu0 %v1212
        %1477 = vmatpush.bf16.msra.mxu0 %v1205
        %1478 = vmatpush.bf16.msra.mxu0 %v1198
        %1479 = vmatpush.bf16.msra.mxu0 %v1191
        %1480 = vmatmul.bf16.gmra.mxu0 %v634
        %v1481 = vpop.f32.mrf.mxu0
        %v1482 = vadd.f32 %v1469, %v1481
        %v1483 = vpop.f32.mrf.mxu0
        %1484 = vdwg.mxu0
        %1485 = vmatpush.bf16.msra.mxu0 %v1185
        %1486 = vmatpush.bf16.msra.mxu0 %v1178
        %1487 = vmatpush.bf16.msra.mxu0 %v1171
        %1488 = vmatpush.bf16.msra.mxu0 %v1164
        %1489 = vmatpush.bf16.msra.mxu0 %v1157
        %1490 = vmatpush.bf16.msra.mxu0 %v1150
        %1491 = vmatpush.bf16.msra.mxu0 %v1143
        %1492 = vmatpush.bf16.msra.mxu0 %v1136
        %1493 = vmatmul.bf16.gmra.mxu0 %v633
        %v1494 = vpop.f32.mrf.mxu0
        %v1495 = vadd.f32 %v770, %v1494
        %v1496 = vpop.f32.mrf.mxu0
        %1497 = vdwg.mxu0
        %1498 = vmatpush.bf16.msra.mxu0 %v1241
        %1499 = vmatpush.bf16.msra.mxu0 %v1234
        %1500 = vmatpush.bf16.msra.mxu0 %v1227
        %1501 = vmatpush.bf16.msra.mxu0 %v1220
        %1502 = vmatpush.bf16.msra.mxu0 %v1213
        %1503 = vmatpush.bf16.msra.mxu0 %v1206
        %1504 = vmatpush.bf16.msra.mxu0 %v1199
        %1505 = vmatpush.bf16.msra.mxu0 %v1192
        %1506 = vmatmul.bf16.gmra.mxu0 %v634
        %v1507 = vpop.f32.mrf.mxu0
        %v1508 = vadd.f32 %v1495, %v1507
        %v1509 = vpop.f32.mrf.mxu0
        %1510 = vdwg.mxu0
        %1511 = vmatpush.bf16.msra.mxu0 %v1186
        %1512 = vmatpush.bf16.msra.mxu0 %v1179
        %1513 = vmatpush.bf16.msra.mxu0 %v1172
        %1514 = vmatpush.bf16.msra.mxu0 %v1165
        %1515 = vmatpush.bf16.msra.mxu0 %v1158
        %1516 = vmatpush.bf16.msra.mxu0 %v1151
        %1517 = vmatpush.bf16.msra.mxu0 %v1144
        %1518 = vmatpush.bf16.msra.mxu0 %v1137
        %1519 = vmatmul.bf16.gmra.mxu0 %v633
        %v1520 = vpop.f32.mrf.mxu0
        %v1521 = vadd.f32 %v771, %v1520
        %v1522 = vpop.f32.mrf.mxu0
        %1523 = vdwg.mxu0
        %1524 = vmatpush.bf16.msra.mxu0 %v1242
        %1525 = vmatpush.bf16.msra.mxu0 %v1235
        %1526 = vmatpush.bf16.msra.mxu0 %v1228
        %1527 = vmatpush.bf16.msra.mxu0 %v1221
        %1528 = vmatpush.bf16.msra.mxu0 %v1214
        %1529 = vmatpush.bf16.msra.mxu0 %v1207
        %1530 = vmatpush.bf16.msra.mxu0 %v1200
        %1531 = vmatpush.bf16.msra.mxu0 %v1193
        %1532 = vmatmul.bf16.gmra.mxu0 %v634
        %v1533 = vpop.f32.mrf.mxu0
        %v1534 = vadd.f32 %v1521, %v1533
        %v1535 = vpop.f32.mrf.mxu0
        %1536 = vdwg.mxu0
        %v1537 = vtanh.pop %v1378
        %v1538 = vtanh.pop %v1404
        %v1539 = vtanh.pop %v1430
        %v1540 = vtanh.pop %v1456
        %v1541 = vtanh.pop %v1482
        %v1542 = vtanh.pop %v1508
        %v1543 = vtanh.pop %v1534
        %1544 = vst [vmem:[%s318] sm:$0xff] %v1537
        %1545 = vst [vmem:[%s318 + $0x8] sm:$0xff] %v1538
        %1546 = vst [vmem:[%s318 + $0x10] sm:$0xff] %v1539
        %1547 = vst [vmem:[%s318 + $0x18] sm:$0xff] %v1540
        %1548 = vst [vmem:[%s318 + $0x20] sm:$0xff] %v1541
        %1549 = vst [vmem:[%s318 + $0x28] sm:$0xff] %v1542
        %vm1550 = vcmask 130048
        %1551 = vst.msk [vmem:[%s318 + $0x30] sm:$0xff] %vm1550, %v1543
      $region64: #{generator_forward.1} parent=51 // pred_fallthru
        _
      %s1552 = smul.u32 %s24, %s23
      %p1553 = scmp.lt.s32.totalorder %s1552, 0
      %s1554 = scalar_select %p1553, %s1552, 0
      %s1555 = smul.addr %s1554, 7
      %s1556 = smul.addr %s1555, 8
      %s1557 = scalar_lea.vmem %s8, %s1556
      // Predicated region
      $region65: #{generator_forward.1} parent=51 // pred_check
        %p1558 = pneg %p224
      $region66: #{generator_forward.1} parent=51 // pred_check_branch
        %1560 = sbr.rel (%p1558) target = $region68
      $region67: #{generator_forward.1} parent=51 // pred_region
        %s1561 = smul.u32 %s24, %s23
      $region68: #{generator_forward.1} parent=51 // pred_fallthru
        _
    $region52: #{generator_forward.1} parent=5 // pred_fallthru
      _
    %p1562 = scmp.le.s32.totalorder 2, %s14
    // Predicated region
    $region69: #{generator_forward.1} parent=5 // pred_check
      %p1563 = pneg %p1562
    $region70: #{generator_forward.1} parent=5 // pred_check_branch
      %1565 = sbr.rel (%p1563) target = $region72
    $region71: #{generator_forward.1} parent=5 // pred_region
      %s1566 = ssub.s32 %s14, 2
      // Predicated region
      $region73: #{generator_forward.1} parent=71 // pred_check
        %p1567 = pneg %p230
      $region74: #{generator_forward.1} parent=71 // pred_check_branch
        %1569 = sbr.rel (%p1567) target = $region76
      $region75: #{generator_forward.1} parent=71 // pred_region
        %s1570 = smul.u32 %s26, %s25
        %p1571 = scmp.lt.s32.totalorder %s1570, 0
        %s1572 = scalar_select %p1571, %s1570, 0
        %s1573 = smul.addr %s1572, 7
        %s1574 = smul.addr %s1573, 8
        %s1575 = scalar_lea.vmem %s8, %s1574
      $region76: #{generator_forward.1} parent=71 // pred_fallthru
        _
    $region72: #{generator_forward.1} parent=5 // pred_fallthru
      _
  $region6: #{generator_forward.1} parent=0 // loop_footer
    %s18 = sadd.s32 1, %s14
  $region7: #{generator_forward.1} parent=0 // loop_footer_branch
    %13 = sbr.rel target = $region3
  $region8: #{generator_forward.1} parent=0 // loop_exit
    _

</llo_original>
